<compile_context>
chip_gen: v6e
topology: v6e:2x2x1
jax: 0.10.0
libtpu: 0.0.40
codegen_flags: <defaults>
</compile_context>

<pallas_src>
import math
import functools

import jax
import jax.numpy as jnp
from jax.experimental import pallas as pl
from jax.experimental.pallas import tpu as pltpu


# ----------------------------------------------------------------------------
# Small helpers: divisor picking, VMEM capacity query, tile selection.
# ----------------------------------------------------------------------------
def _pick_divisor(n, candidates, default):
    for c in candidates:
        if n % c == 0:
            return c
    return default


def _vmem_capacity_bytes():
    """Physical per-core VMEM; conservative 64 MiB (v7x) fallback."""
    try:
        info = pltpu.get_tpu_info()
        cap = getattr(info, "vmem_capacity_bytes", None)
        if cap:
            return int(cap)
    except Exception:
        pass
    return 64 * 1024 * 1024


def _recurrence_vmem_bytes(tb, ts, E, H, itemsize=2):
    """Estimate of the recurrence kernel's VMEM working set for tile (tb, ts)."""
    GH = 4 * H
    f32 = 4
    tot = 0
    tot += 2 * ts * tb * E * itemsize      # x block (double-buffered)
    tot += 2 * ts * tb * H * itemsize      # h_out block (double-buffered)
    tot += 2 * tb * H * itemsize           # c_out block
    tot += 2 * E * GH * itemsize           # W_in (resident; counted x2 conservatively)
    tot += 2 * GH * itemsize               # gate bias
    tot += 2 * H * GH * itemsize           # fused recurrent matrix R_cat
    tot += 4 * tb * H * itemsize           # h0 + c0
    tot += 2 * tb * H * f32                # f32 h/c carry scratch
    return tot + (2 << 20)                 # headroom


def _choose_recurrence_tiles(Bp, T, E, H, budget_bytes):
    """Pick (batch_tile, ts_block): maximize the MXU M dim (batch tile) under the
    VMEM budget; keep >=2 batch tiles (v7x megacore) when that doesn't drop the
    tile below 128; cap the static timestep unroll at 8."""
    tb_cands = [c for c in (256, 128, 64, 32, 16, 8) if Bp % c == 0]
    two_tile = [c for c in tb_cands if Bp // c >= 2]
    if two_tile and two_tile[0] >= 128:
        tb_cands = two_tile
    ts_cands = [c for c in (8, 4, 2, 1) if T % c == 0]   # divisor => no partial blocks
    for tb in tb_cands:
        for ts in ts_cands:
            if _recurrence_vmem_bytes(tb, ts, E, H) <= budget_bytes:
                return tb, ts
    return tb_cands[-1], ts_cands[-1]


# ----------------------------------------------------------------------------
# Kernel 1: tiled matmul + bias with a K-reduction grid axis and f32 accumulator.
# Used for the output projection (h @ W_proj^T + b_proj).  bf16 operands, f32 acc.
# ----------------------------------------------------------------------------
def _matmul_bias_kernel(x_ref, w_ref, b_ref, o_ref, acc_ref):
    @pl.when(pl.program_id(2) == 0)
    def _():
        acc_ref[...] = jnp.zeros_like(acc_ref)

    acc_ref[...] += jnp.dot(x_ref[...], w_ref[...],
                            preferred_element_type=jnp.float32)

    @pl.when(pl.program_id(2) == pl.num_programs(2) - 1)
    def _():
        o_ref[...] = (acc_ref[...] + b_ref[...].astype(jnp.float32)).astype(o_ref.dtype)


def matmul_bias(x, w, b, out_dtype, vmem_limit):
    M, K = x.shape
    K2, N = w.shape
    assert K == K2 and b.shape == (N,)

    # Pad M to a multiple of 128 so the MXU M tile stays full even for awkward B*T.
    if M >= 128 and M % 128 != 0:
        Mp = ((M + 127) // 128) * 128
        x = jnp.pad(x, ((0, Mp - M), (0, 0)))
    else:
        Mp = M

    if Mp % 256 == 0:
        tm = 256
    elif Mp % 128 == 0:
        tm = 128
    else:
        tm = Mp                                   # small M (<128, multiple of 8)
    tn = _pick_divisor(N, (512, 256, 128), N)     # V is pre-padded to 128 at init
    tk = _pick_divisor(K, (512, 256, 128), K)

    out = pl.pallas_call(
        _matmul_bias_kernel,
        out_shape=jax.ShapeDtypeStruct((Mp, N), out_dtype),
        grid_spec=pltpu.PrefetchScalarGridSpec(
            num_scalar_prefetch=0,
            grid=(Mp // tm, N // tn, K // tk),
            in_specs=[
                pl.BlockSpec((tm, tk), lambda i, j, k: (i, k)),
                pl.BlockSpec((tk, tn), lambda i, j, k: (k, j)),
                pl.BlockSpec((1, tn), lambda i, j, k: (0, j)),
            ],
            out_specs=pl.BlockSpec((tm, tn), lambda i, j, k: (i, j)),
            scratch_shapes=[pltpu.VMEM((tm, tn), jnp.float32)],
        ),
        compiler_params=pltpu.CompilerParams(
            dimension_semantics=("parallel", "parallel", "arbitrary"),
            vmem_limit_bytes=vmem_limit,
        ),
    )(x, w, b.reshape(1, N))
    return out[:M] if Mp != M else out


# ----------------------------------------------------------------------------
# Kernel 2: the LSTM recurrence (time-major, fused input projection).
#   grid = (Bp // TB, T // TS): batch tiles "parallel", time blocks "arbitrary".
#   h/c carried across time blocks in f32 VMEM scratch.
#   Per step: one dense [TB, E] x-slice load, two bf16 MXU matmuls (x@W_in and
#   h@R_cat -> all four gates), dense [TB, H] h store (time-major output).
# ----------------------------------------------------------------------------
def _lstm_block_kernel(x_ref, w_in_ref, b_ref, r_ref, h0_ref, c0_ref,
                       h_out_ref, c_out_ref, h_sc, c_sc, *, ts_block, hid):
    t_blk = pl.program_id(1)

    @pl.when(t_blk == 0)
    def _():
        h_sc[...] = h0_ref[...].astype(jnp.float32)
        c_sc[...] = c0_ref[...].astype(jnp.float32)

    h = h_sc[...]                                  # [TB, H] f32 carry
    c = c_sc[...]
    bg = b_ref[...].astype(jnp.float32)            # [1, 4H] gate bias (hoisted)

    # Static unroll capped at 8 steps: bounds vreg pressure while amortising
    # the per-grid-step overhead; steps are serially dependent anyway.
    for t in range(ts_block):
        # Fused input projection for this step (no wx HBM round-trip); the
        # operands are read straight from VMEM refs inside the loop so no large
        # block is materialised up front.
        pre = jnp.dot(x_ref[t], w_in_ref[...], preferred_element_type=jnp.float32)
        # All four gate pre-activations in one bf16 MXU matmul.
        pre += jnp.dot(h.astype(r_ref.dtype), r_ref[...],
                       preferred_element_type=jnp.float32)
        pre += bg
        i_g = jax.nn.sigmoid(pre[:, 0 * hid:1 * hid])
        f_g = jax.nn.sigmoid(pre[:, 1 * hid:2 * hid])
        z_g = jnp.tanh(pre[:, 2 * hid:3 * hid])
        o_g = jax.nn.sigmoid(pre[:, 3 * hid:4 * hid])
        c = f_g * c + i_g * z_g
        h = o_g * jnp.tanh(c)
        # Time-major output block: a full-sublane dense [TB, H] store every step.
        h_out_ref[t] = h.astype(h_out_ref.dtype)

    h_sc[...] = h
    c_sc[...] = c

    # Only the last time block ever needs to produce the final cell state.
    @pl.when(t_blk == pl.num_programs(1) - 1)
    def _():
        c_out_ref[...] = c.astype(c_out_ref.dtype)


def lstm_recurrence(x_tm, w_in, b_gate, r_cat, h0, c0, out_dtype,
                    ts_block, batch_tile, vmem_limit):
    # x_tm: [T, Bp, E] time-major;  w_in: [E, 4H];  r_cat: [H, 4H];  h0/c0: [Bp, H]
    T, Bp, E = x_tm.shape
    H = h0.shape[1]
    GH = 4 * H
    assert Bp % batch_tile == 0 and T % ts_block == 0
    kern = functools.partial(_lstm_block_kernel, ts_block=ts_block, hid=H)
    return pl.pallas_call(
        kern,
        out_shape=(
            jax.ShapeDtypeStruct((T, Bp, H), out_dtype),   # full h sequence, time-major
            jax.ShapeDtypeStruct((Bp, H), out_dtype),      # final c only
        ),
        grid_spec=pltpu.PrefetchScalarGridSpec(
            num_scalar_prefetch=0,
            grid=(Bp // batch_tile, T // ts_block),
            in_specs=[
                pl.BlockSpec((ts_block, batch_tile, E), lambda b, t: (t, b, 0)),
                pl.BlockSpec((E, GH), lambda b, t: (0, 0)),        # W_in (resident)
                pl.BlockSpec((1, GH), lambda b, t: (0, 0)),        # gate bias
                pl.BlockSpec((H, GH), lambda b, t: (0, 0)),        # R_cat (resident)
                pl.BlockSpec((batch_tile, H), lambda b, t: (b, 0)),
                pl.BlockSpec((batch_tile, H), lambda b, t: (b, 0)),
            ],
            out_specs=[
                pl.BlockSpec((ts_block, batch_tile, H), lambda b, t: (t, b, 0)),
                pl.BlockSpec((batch_tile, H), lambda b, t: (b, 0)),
            ],
            scratch_shapes=[
                pltpu.VMEM((batch_tile, H), jnp.float32),   # h carry
                pltpu.VMEM((batch_tile, H), jnp.float32),   # c carry
            ],
        ),
        compiler_params=pltpu.CompilerParams(
            dimension_semantics=("parallel", "arbitrary"),
            vmem_limit_bytes=vmem_limit,
        ),
    )(x_tm, w_in, b_gate.reshape(1, GH), r_cat, h0, c0)


# ----------------------------------------------------------------------------
# Parameter container + forward pass (glue in plain JAX, hot paths in Pallas).
# ----------------------------------------------------------------------------
class PallasLSTM:
    def __init__(self, input_size, output_size, hidden_size, num_heads,
                 head_size=0, dtype=jnp.bfloat16, key=None):
        self.G = 4
        self.N = num_heads
        self.D = head_size if head_size > 0 else hidden_size // num_heads
        assert hidden_size % num_heads == 0
        self.E = input_size
        self.V = output_size
        self.H = self.N * self.D
        self.dtype = dtype

        key = key if key is not None else jax.random.PRNGKey(0)
        k1, k2, k3 = jax.random.split(key, 3)
        # deterministic synthetic params (shapes mirror the torch module)
        self.W_in = (jax.random.normal(k1, (self.E, self.G * self.H), jnp.float32)
                     / math.sqrt(self.E)).astype(dtype)
        self.R = (jax.random.normal(k2, (self.G, self.N, self.D, self.D), jnp.float32)
                  / math.sqrt(self.D)).astype(dtype)
        self.b = jnp.zeros((self.G, self.N, self.D), dtype)
        self.W_proj = (jax.random.normal(k3, (self.V, self.H), jnp.float32)
                       / math.sqrt(self.D)).astype(dtype)
        self.b_proj = jnp.zeros((self.V,), dtype)

        # Gate-fused recurrent matrix [H, 4H]: gates concatenated along the lane
        # dim, block-diagonal per head inside each gate block, so one MXU matmul
        # produces all gate pre-activations.
        # TODO(synk): for D >= 128 store R per head ([N, D, 4D]) and do head-batched
        # matmuls instead of this N-fold-sparse dense form (N x less MXU work/VMEM);
        # the dense form is kept here since it is the right choice for D < 128.
        r_cat = jnp.zeros((self.H, self.G * self.H), jnp.float32)
        Rf = self.R.astype(jnp.float32)
        for g in range(self.G):
            for n in range(self.N):
                r_cat = r_cat.at[n * self.D:(n + 1) * self.D,
                                 g * self.H + n * self.D:
                                 g * self.H + (n + 1) * self.D].set(Rf[g, n])
        self.R_cat = r_cat.astype(dtype)
        # Gate bias in W_in's column order (g-major, then n, then d).
        self.b_gate = self.b.reshape(self.G * self.H)

        # Output projection: cache W_proj^T and pad the vocab dim to a multiple of
        # 128 so the projection's N tile is always lane-aligned.
        self.W_proj_t = jnp.transpose(self.W_proj)                      # [H, V]
        if self.V >= 128 and self.V % 128 != 0:
            self.Vp = ((self.V + 127) // 128) * 128
            self.W_proj_t = jnp.pad(self.W_proj_t, ((0, 0), (0, self.Vp - self.V)))
            self.b_proj_p = jnp.pad(self.b_proj, (0, self.Vp - self.V))
        else:
            self.Vp = self.V
            self.b_proj_p = self.b_proj

    def __call__(self, x_emb, hidden=None, memory=None):
        # x_emb: [B, T, E]  ->  logits [B, T, V], None, (hN, cN) each [1, B, H]
        B, T, E = x_emb.shape
        in_dtype = x_emb.dtype

        # Generation-aware VMEM budget (v7x: 64 MiB/TC, v5e/v6e: 128 MiB).
        cap = _vmem_capacity_bytes()
        vmem_limit = min(int(cap * 0.85), 100 * 1024 * 1024)
        budget = min(int(cap * 0.70), 88 * 1024 * 1024)

        Bp = max(8, ((B + 7) // 8) * 8)          # sublane-friendly batch pad
        batch_tile, ts_block = _choose_recurrence_tiles(Bp, T, E, self.H, budget)

        x_p = x_emb.astype(self.dtype)
        if Bp != B:
            x_p = jnp.pad(x_p, ((0, Bp - B), (0, 0), (0, 0)))
        # Time-major activations: dense per-step loads/stores inside the recurrence.
        x_tm = jnp.swapaxes(x_p, 0, 1)           # [T, Bp, E]

        # ---- initial states ----
        if hidden is None:
            h0 = jnp.zeros((Bp, self.H), self.dtype)
            c0 = jnp.zeros((Bp, self.H), self.dtype)
        else:
            h0_in, c0_in = hidden                # [1, B, H] each
            h0 = h0_in.reshape(B, self.H).astype(self.dtype)
            c0 = c0_in.reshape(B, self.H).astype(self.dtype)
            if Bp != B:
                h0 = jnp.pad(h0, ((0, Bp - B), (0, 0)))
                c0 = jnp.pad(c0, ((0, Bp - B), (0, 0)))

        # ---- recurrence (fused input projection, parallel-batch / sequential-time) ----
        h_tm, c_last = lstm_recurrence(x_tm, self.W_in, self.b_gate, self.R_cat,
                                       h0, c0, self.dtype, ts_block, batch_tile,
                                       vmem_limit)          # [T,Bp,H], [Bp,H]

        # ---- output projection (Pallas tiled matmul with K accumulator) ----
        # Transpose whichever side is smaller per token (H vs V) back to batch-major.
        if self.Vp <= self.H:
            logits_tm = matmul_bias(h_tm.reshape(T * Bp, self.H), self.W_proj_t,
                                    self.b_proj_p, self.dtype, vmem_limit)
            logits = jnp.swapaxes(logits_tm.reshape(T, Bp, self.Vp), 0, 1)
        else:
            h_bm = jnp.swapaxes(h_tm, 0, 1)                  # [Bp, T, H]
            logits = matmul_bias(h_bm.reshape(Bp * T, self.H), self.W_proj_t,
                                 self.b_proj_p, self.dtype, vmem_limit)
            logits = logits.reshape(Bp, T, self.Vp)
        logits = logits[:B, :, :self.V]

        hN = h_tm[T - 1, :B, :][None].astype(in_dtype)       # [1, B, H]
        cN = c_last[:B][None].astype(in_dtype)               # [1, B, H]
        return logits, None, (hN, cN)


# ----------------------------------------------------------------------------
# Pure-JAX reference for a sanity check (mirrors the kernel's bf16 rounding of
# the matmul inputs; accumulation stays f32 as on the MXU).
# ----------------------------------------------------------------------------
def reference_forward(model, x_emb):
    B, T, E = x_emb.shape
    wx = x_emb.astype(jnp.float32) @ model.W_in.astype(jnp.float32)
    wx = wx + model.b.reshape(1, 1, -1).astype(jnp.float32)
    wx = wx.reshape(B, T, model.G, model.N, model.D)
    R = model.R.astype(jnp.float32)
    h = jnp.zeros((B, model.N, model.D), jnp.float32)
    c = jnp.zeros((B, model.N, model.D), jnp.float32)
    hs = []
    for t in range(T):
        h_mm = h.astype(model.dtype).astype(jnp.float32)     # kernel matmul input is bf16
        pre = wx[:, t] + jnp.einsum('bnd,gnde->bgne', h_mm, R)
        i = jax.nn.sigmoid(pre[:, 0]); f = jax.nn.sigmoid(pre[:, 1])
        z = jnp.tanh(pre[:, 2]);       o = jax.nn.sigmoid(pre[:, 3])
        c = f * c + i * z
        h = o * jnp.tanh(c)
        hs.append(h.reshape(B, model.H).astype(model.dtype).astype(jnp.float32))
    h_seq = jnp.stack(hs, axis=1)                            # [B, T, H]
    logits = h_seq @ model.W_proj.T.astype(jnp.float32) + model.b_proj.astype(jnp.float32)
    return logits


if __name__ == "__main__":
    B, T = 2, 8
    input_size, output_size, hidden_size = 16, 16, 32
    num_heads, head_size = 2, 16  # N*D == hidden_size

    key = jax.random.PRNGKey(0)
    k_param, k_bias, k_x = jax.random.split(key, 3)

    model = PallasLSTM(input_size, output_size, hidden_size,
                       num_heads, head_size, dtype=jnp.bfloat16, key=k_param)

    # Use a non-zero gate bias so the bias path (column-order fold) is exercised.
    model.b = (0.05 * jax.random.normal(k_bias, (model.G, model.N, model.D),
                                        jnp.float32)).astype(model.dtype)
    model.b_gate = model.b.reshape(model.G * model.H)

    x_emb = jax.random.normal(k_x, (B, T, input_size), jnp.float32).astype(jnp.bfloat16)

    logits, memory, (hN, cN) = model(x_emb)
    logits = jax.block_until_ready(logits)
    hN = jax.block_until_ready(hN)
    cN = jax.block_until_ready(cN)

    assert logits.shape == (B, T, output_size)
    assert hN.shape == (1, B, hidden_size) and cN.shape == (1, B, hidden_size)
    assert memory is None

    ref = reference_forward(model, x_emb)
    diff = float(jnp.max(jnp.abs(logits.astype(jnp.float32) - ref)))
    assert diff < 0.15, f"max abs diff too large: {diff}"

    print("KERNEL_OK")
</pallas_src>

<mosaic_0001>
module attributes {stable_mosaic.version = 11 : i64} {
  func.func @_lstm_block_kernel(%arg0: i32, %arg1: i32, %arg2: memref<8x8x16xbf16, #tpu.memory_space<vmem>>, %arg3: memref<16x128xbf16, #tpu.memory_space<vmem>>, %arg4: memref<1x128xbf16, #tpu.memory_space<vmem>>, %arg5: memref<32x128xbf16, #tpu.memory_space<vmem>>, %arg6: memref<8x32xbf16, #tpu.memory_space<vmem>>, %arg7: memref<8x32xbf16, #tpu.memory_space<vmem>>, %arg8: memref<8x8x32xbf16, #tpu.memory_space<vmem>>, %arg9: memref<8x32xbf16, #tpu.memory_space<vmem>>, %arg10: memref<8x32xf32, #tpu.memory_space<vmem>>, %arg11: memref<8x32xf32, #tpu.memory_space<vmem>>) attributes {dimension_semantics = [#tpu.dimension_semantics<parallel>, #tpu.dimension_semantics<arbitrary>], iteration_bounds = array<i64: 1, 1>, scalar_prefetch = 0 : i64, scratch_operands = 2 : i64, tpu.core_type = #tpu.core_type<tc>, window_params = [{transform_indices = @transform_0, window_bounds = array<i64: 8, 8, 16>}, {pipeline_mode = #tpu.pipeline_mode<synchronous>, transform_indices = @transform_1, window_bounds = array<i64: 16, 128>}, {pipeline_mode = #tpu.pipeline_mode<synchronous>, transform_indices = @transform_2, window_bounds = array<i64: 1, 128>}, {pipeline_mode = #tpu.pipeline_mode<synchronous>, transform_indices = @transform_3, window_bounds = array<i64: 32, 128>}, {transform_indices = @transform_4, window_bounds = array<i64: 8, 32>}, {transform_indices = @transform_5, window_bounds = array<i64: 8, 32>}, {transform_indices = @transform_6, window_bounds = array<i64: 8, 8, 32>}, {transform_indices = @transform_7, window_bounds = array<i64: 8, 32>}]} {
    %c0_i32 = arith.constant 0 : i32
    %0 = arith.cmpi eq, %arg1, %c0_i32 : i32
    %1 = arith.extui %0 : i1 to i32
    %c0_i32_0 = arith.constant 0 : i32
    %2 = arith.cmpi ne, %1, %c0_i32_0 : i32
    scf.if %2 {
      %c0_124 = arith.constant 0 : index
      %c0_125 = arith.constant 0 : index
      %324 = vector.load %arg6[%c0_124, %c0_125] : memref<8x32xbf16, #tpu.memory_space<vmem>>, vector<8x32xbf16>
      %325 = arith.extf %324 : vector<8x32xbf16> to vector<8x32xf32>
      %c0_126 = arith.constant 0 : index
      %c0_127 = arith.constant 0 : index
      %326 = vector.load %arg10[%c0_126, %c0_127] : memref<8x32xf32, #tpu.memory_space<vmem>>, vector<8x32xf32>
      tpu.vector_store %arg10[%c0_126, %c0_127], %325 {strides = array<i32>} : memref<8x32xf32, #tpu.memory_space<vmem>>, vector<8x32xf32>,
      %c0_128 = arith.constant 0 : index
      %c0_129 = arith.constant 0 : index
      %327 = vector.load %arg7[%c0_128, %c0_129] : memref<8x32xbf16, #tpu.memory_space<vmem>>, vector<8x32xbf16>
      %328 = arith.extf %327 : vector<8x32xbf16> to vector<8x32xf32>
      %c0_130 = arith.constant 0 : index
      %c0_131 = arith.constant 0 : index
      %329 = vector.load %arg11[%c0_130, %c0_131] : memref<8x32xf32, #tpu.memory_space<vmem>>, vector<8x32xf32>
      tpu.vector_store %arg11[%c0_130, %c0_131], %328 {strides = array<i32>} : memref<8x32xf32, #tpu.memory_space<vmem>>, vector<8x32xf32>,
    } else {
    }
    %c0 = arith.constant 0 : index
    %c0_1 = arith.constant 0 : index
    %3 = vector.load %arg10[%c0, %c0_1] : memref<8x32xf32, #tpu.memory_space<vmem>>, vector<8x32xf32>
    %c0_2 = arith.constant 0 : index
    %c0_3 = arith.constant 0 : index
    %4 = vector.load %arg11[%c0_2, %c0_3] : memref<8x32xf32, #tpu.memory_space<vmem>>, vector<8x32xf32>
    %c0_4 = arith.constant 0 : index
    %c0_5 = arith.constant 0 : index
    %5 = vector.load %arg4[%c0_4, %c0_5] : memref<1x128xbf16, #tpu.memory_space<vmem>>, vector<1x128xbf16>
    %6 = arith.extf %5 : vector<1x128xbf16> to vector<1x128xf32>
    %c0_6 = arith.constant 0 : index
    %c0_7 = arith.constant 0 : index
    %c0_8 = arith.constant 0 : index
    %7 = vector.load %arg2[%c0_6, %c0_7, %c0_8] : memref<8x8x16xbf16, #tpu.memory_space<vmem>>, vector<1x8x16xbf16>
    %8 = vector.shape_cast %7 : vector<1x8x16xbf16> to vector<8x16xbf16>
    %c0_9 = arith.constant 0 : index
    %c0_10 = arith.constant 0 : index
    %9 = vector.load %arg3[%c0_9, %c0_10] : memref<16x128xbf16, #tpu.memory_space<vmem>>, vector<16x128xbf16>
    %cst = arith.constant dense<0.000000e+00> : vector<8x128xf32>
    %10 = tpu.matmul %8, %9, %cst {dimension_numbers = #tpu.dot_dimension_numbers<[1], [0], [0], [1], [0, 0, 1, 1], [], []>} : vector<8x16xbf16>, vector<16x128xbf16>, vector<8x128xf32> -> vector<8x128xf32>
    %11 = arith.truncf %3 : vector<8x32xf32> to vector<8x32xbf16>
    %c0_11 = arith.constant 0 : index
    %c0_12 = arith.constant 0 : index
    %12 = vector.load %arg5[%c0_11, %c0_12] : memref<32x128xbf16, #tpu.memory_space<vmem>>, vector<32x128xbf16>
    %cst_13 = arith.constant dense<0.000000e+00> : vector<8x128xf32>
    %13 = tpu.matmul %11, %12, %cst_13 {dimension_numbers = #tpu.dot_dimension_numbers<[1], [0], [0], [1], [0, 0, 1, 1], [], []>} : vector<8x32xbf16>, vector<32x128xbf16>, vector<8x128xf32> -> vector<8x128xf32>
    %14 = arith.addf %10, %13 : vector<8x128xf32>
    %15 = vector.broadcast %6 : vector<1x128xf32> to vector<8x128xf32>
    %16 = arith.addf %14, %15 : vector<8x128xf32>
    %17 = vector.extract_strided_slice %16 {offsets = [0, 0], sizes = [8, 32], strides = [1, 1]} : vector<8x128xf32> to vector<8x32xf32>
    %18 = arith.negf %17 : vector<8x32xf32>
    %19 = math.exp %18 : vector<8x32xf32>
    %cst_14 = arith.constant 1.000000e+00 : f32
    %20 = vector.broadcast %cst_14 : f32 to vector<8x32xf32>
    %21 = arith.addf %20, %19 : vector<8x32xf32>
    %22 = arith.divf %20, %21 : vector<8x32xf32>
    %23 = vector.extract_strided_slice %16 {offsets = [0, 32], sizes = [8, 32], strides = [1, 1]} : vector<8x128xf32> to vector<8x32xf32>
    %24 = arith.negf %23 : vector<8x32xf32>
    %25 = math.exp %24 : vector<8x32xf32>
    %cst_15 = arith.constant 1.000000e+00 : f32
    %26 = vector.broadcast %cst_15 : f32 to vector<8x32xf32>
    %27 = arith.addf %26, %25 : vector<8x32xf32>
    %28 = arith.divf %26, %27 : vector<8x32xf32>
    %29 = vector.extract_strided_slice %16 {offsets = [0, 64], sizes = [8, 32], strides = [1, 1]} : vector<8x128xf32> to vector<8x32xf32>
    %30 = math.tanh %29 : vector<8x32xf32>
    %31 = vector.extract_strided_slice %16 {offsets = [0, 96], sizes = [8, 32], strides = [1, 1]} : vector<8x128xf32> to vector<8x32xf32>
    %32 = arith.negf %31 : vector<8x32xf32>
    %33 = math.exp %32 : vector<8x32xf32>
    %cst_16 = arith.constant 1.000000e+00 : f32
    %34 = vector.broadcast %cst_16 : f32 to vector<8x32xf32>
    %35 = arith.addf %34, %33 : vector<8x32xf32>
    %36 = arith.divf %34, %35 : vector<8x32xf32>
    %37 = arith.mulf %28, %4 : vector<8x32xf32>
    %38 = arith.mulf %22, %30 : vector<8x32xf32>
    %39 = arith.addf %37, %38 : vector<8x32xf32>
    %40 = math.tanh %39 : vector<8x32xf32>
    %41 = arith.mulf %36, %40 : vector<8x32xf32>
    %42 = arith.truncf %41 : vector<8x32xf32> to vector<8x32xbf16>
    %c0_17 = arith.constant 0 : index
    %c0_18 = arith.constant 0 : index
    %c0_19 = arith.constant 0 : index
    %43 = vector.load %arg8[%c0_17, %c0_18, %c0_19] : memref<8x8x32xbf16, #tpu.memory_space<vmem>>, vector<1x8x32xbf16>
    %44 = vector.shape_cast %43 : vector<1x8x32xbf16> to vector<8x32xbf16>
    %45 = vector.shape_cast %42 : vector<8x32xbf16> to vector<1x8x32xbf16>
    tpu.vector_store %arg8[%c0_17, %c0_18, %c0_19], %45 {strides = array<i32>} : memref<8x8x32xbf16, #tpu.memory_space<vmem>>, vector<1x8x32xbf16>,
    %c1 = arith.constant 1 : index
    %c0_20 = arith.constant 0 : index
    %c0_21 = arith.constant 0 : index
    %46 = vector.load %arg2[%c1, %c0_20, %c0_21] : memref<8x8x16xbf16, #tpu.memory_space<vmem>>, vector<1x8x16xbf16>
    %47 = vector.shape_cast %46 : vector<1x8x16xbf16> to vector<8x16xbf16>
    %c0_22 = arith.constant 0 : index
    %c0_23 = arith.constant 0 : index
    %48 = vector.load %arg3[%c0_22, %c0_23] : memref<16x128xbf16, #tpu.memory_space<vmem>>, vector<16x128xbf16>
    %cst_24 = arith.constant dense<0.000000e+00> : vector<8x128xf32>
    %49 = tpu.matmul %47, %48, %cst_24 {dimension_numbers = #tpu.dot_dimension_numbers<[1], [0], [0], [1], [0, 0, 1, 1], [], []>} : vector<8x16xbf16>, vector<16x128xbf16>, vector<8x128xf32> -> vector<8x128xf32>
    %50 = arith.truncf %41 : vector<8x32xf32> to vector<8x32xbf16>
    %c0_25 = arith.constant 0 : index
    %c0_26 = arith.constant 0 : index
    %51 = vector.load %arg5[%c0_25, %c0_26] : memref<32x128xbf16, #tpu.memory_space<vmem>>, vector<32x128xbf16>
    %cst_27 = arith.constant dense<0.000000e+00> : vector<8x128xf32>
    %52 = tpu.matmul %50, %51, %cst_27 {dimension_numbers = #tpu.dot_dimension_numbers<[1], [0], [0], [1], [0, 0, 1, 1], [], []>} : vector<8x32xbf16>, vector<32x128xbf16>, vector<8x128xf32> -> vector<8x128xf32>
    %53 = arith.addf %49, %52 : vector<8x128xf32>
    %54 = vector.broadcast %6 : vector<1x128xf32> to vector<8x128xf32>
    %55 = arith.addf %53, %54 : vector<8x128xf32>
    %56 = vector.extract_strided_slice %55 {offsets = [0, 0], sizes = [8, 32], strides = [1, 1]} : vector<8x128xf32> to vector<8x32xf32>
    %57 = arith.negf %56 : vector<8x32xf32>
    %58 = math.exp %57 : vector<8x32xf32>
    %cst_28 = arith.constant 1.000000e+00 : f32
    %59 = vector.broadcast %cst_28 : f32 to vector<8x32xf32>
    %60 = arith.addf %59, %58 : vector<8x32xf32>
    %61 = arith.divf %59, %60 : vector<8x32xf32>
    %62 = vector.extract_strided_slice %55 {offsets = [0, 32], sizes = [8, 32], strides = [1, 1]} : vector<8x128xf32> to vector<8x32xf32>
    %63 = arith.negf %62 : vector<8x32xf32>
    %64 = math.exp %63 : vector<8x32xf32>
    %cst_29 = arith.constant 1.000000e+00 : f32
    %65 = vector.broadcast %cst_29 : f32 to vector<8x32xf32>
    %66 = arith.addf %65, %64 : vector<8x32xf32>
    %67 = arith.divf %65, %66 : vector<8x32xf32>
    %68 = vector.extract_strided_slice %55 {offsets = [0, 64], sizes = [8, 32], strides = [1, 1]} : vector<8x128xf32> to vector<8x32xf32>
    %69 = math.tanh %68 : vector<8x32xf32>
    %70 = vector.extract_strided_slice %55 {offsets = [0, 96], sizes = [8, 32], strides = [1, 1]} : vector<8x128xf32> to vector<8x32xf32>
    %71 = arith.negf %70 : vector<8x32xf32>
    %72 = math.exp %71 : vector<8x32xf32>
    %cst_30 = arith.constant 1.000000e+00 : f32
    %73 = vector.broadcast %cst_30 : f32 to vector<8x32xf32>
    %74 = arith.addf %73, %72 : vector<8x32xf32>
    %75 = arith.divf %73, %74 : vector<8x32xf32>
    %76 = arith.mulf %67, %39 : vector<8x32xf32>
    %77 = arith.mulf %61, %69 : vector<8x32xf32>
    %78 = arith.addf %76, %77 : vector<8x32xf32>
    %79 = math.tanh %78 : vector<8x32xf32>
    %80 = arith.mulf %75, %79 : vector<8x32xf32>
    %81 = arith.truncf %80 : vector<8x32xf32> to vector<8x32xbf16>
    %c1_31 = arith.constant 1 : index
    %c0_32 = arith.constant 0 : index
    %c0_33 = arith.constant 0 : index
    %82 = vector.load %arg8[%c1_31, %c0_32, %c0_33] : memref<8x8x32xbf16, #tpu.memory_space<vmem>>, vector<1x8x32xbf16>
    %83 = vector.shape_cast %82 : vector<1x8x32xbf16> to vector<8x32xbf16>
    %84 = vector.shape_cast %81 : vector<8x32xbf16> to vector<1x8x32xbf16>
    tpu.vector_store %arg8[%c1_31, %c0_32, %c0_33], %84 {strides = array<i32>} : memref<8x8x32xbf16, #tpu.memory_space<vmem>>, vector<1x8x32xbf16>,
    %c2 = arith.constant 2 : index
    %c0_34 = arith.constant 0 : index
    %c0_35 = arith.constant 0 : index
    %85 = vector.load %arg2[%c2, %c0_34, %c0_35] : memref<8x8x16xbf16, #tpu.memory_space<vmem>>, vector<1x8x16xbf16>
    %86 = vector.shape_cast %85 : vector<1x8x16xbf16> to vector<8x16xbf16>
    %c0_36 = arith.constant 0 : index
    %c0_37 = arith.constant 0 : index
    %87 = vector.load %arg3[%c0_36, %c0_37] : memref<16x128xbf16, #tpu.memory_space<vmem>>, vector<16x128xbf16>
    %cst_38 = arith.constant dense<0.000000e+00> : vector<8x128xf32>
    %88 = tpu.matmul %86, %87, %cst_38 {dimension_numbers = #tpu.dot_dimension_numbers<[1], [0], [0], [1], [0, 0, 1, 1], [], []>} : vector<8x16xbf16>, vector<16x128xbf16>, vector<8x128xf32> -> vector<8x128xf32>
    %89 = arith.truncf %80 : vector<8x32xf32> to vector<8x32xbf16>
    %c0_39 = arith.constant 0 : index
    %c0_40 = arith.constant 0 : index
    %90 = vector.load %arg5[%c0_39, %c0_40] : memref<32x128xbf16, #tpu.memory_space<vmem>>, vector<32x128xbf16>
    %cst_41 = arith.constant dense<0.000000e+00> : vector<8x128xf32>
    %91 = tpu.matmul %89, %90, %cst_41 {dimension_numbers = #tpu.dot_dimension_numbers<[1], [0], [0], [1], [0, 0, 1, 1], [], []>} : vector<8x32xbf16>, vector<32x128xbf16>, vector<8x128xf32> -> vector<8x128xf32>
    %92 = arith.addf %88, %91 : vector<8x128xf32>
    %93 = vector.broadcast %6 : vector<1x128xf32> to vector<8x128xf32>
    %94 = arith.addf %92, %93 : vector<8x128xf32>
    %95 = vector.extract_strided_slice %94 {offsets = [0, 0], sizes = [8, 32], strides = [1, 1]} : vector<8x128xf32> to vector<8x32xf32>
    %96 = arith.negf %95 : vector<8x32xf32>
    %97 = math.exp %96 : vector<8x32xf32>
    %cst_42 = arith.constant 1.000000e+00 : f32
    %98 = vector.broadcast %cst_42 : f32 to vector<8x32xf32>
    %99 = arith.addf %98, %97 : vector<8x32xf32>
    %100 = arith.divf %98, %99 : vector<8x32xf32>
    %101 = vector.extract_strided_slice %94 {offsets = [0, 32], sizes = [8, 32], strides = [1, 1]} : vector<8x128xf32> to vector<8x32xf32>
    %102 = arith.negf %101 : vector<8x32xf32>
    %103 = math.exp %102 : vector<8x32xf32>
    %cst_43 = arith.constant 1.000000e+00 : f32
    %104 = vector.broadcast %cst_43 : f32 to vector<8x32xf32>
    %105 = arith.addf %104, %103 : vector<8x32xf32>
    %106 = arith.divf %104, %105 : vector<8x32xf32>
    %107 = vector.extract_strided_slice %94 {offsets = [0, 64], sizes = [8, 32], strides = [1, 1]} : vector<8x128xf32> to vector<8x32xf32>
    %108 = math.tanh %107 : vector<8x32xf32>
    %109 = vector.extract_strided_slice %94 {offsets = [0, 96], sizes = [8, 32], strides = [1, 1]} : vector<8x128xf32> to vector<8x32xf32>
    %110 = arith.negf %109 : vector<8x32xf32>
    %111 = math.exp %110 : vector<8x32xf32>
    %cst_44 = arith.constant 1.000000e+00 : f32
    %112 = vector.broadcast %cst_44 : f32 to vector<8x32xf32>
    %113 = arith.addf %112, %111 : vector<8x32xf32>
    %114 = arith.divf %112, %113 : vector<8x32xf32>
    %115 = arith.mulf %106, %78 : vector<8x32xf32>
    %116 = arith.mulf %100, %108 : vector<8x32xf32>
    %117 = arith.addf %115, %116 : vector<8x32xf32>
    %118 = math.tanh %117 : vector<8x32xf32>
    %119 = arith.mulf %114, %118 : vector<8x32xf32>
    %120 = arith.truncf %119 : vector<8x32xf32> to vector<8x32xbf16>
    %c2_45 = arith.constant 2 : index
    %c0_46 = arith.constant 0 : index
    %c0_47 = arith.constant 0 : index
    %121 = vector.load %arg8[%c2_45, %c0_46, %c0_47] : memref<8x8x32xbf16, #tpu.memory_space<vmem>>, vector<1x8x32xbf16>
    %122 = vector.shape_cast %121 : vector<1x8x32xbf16> to vector<8x32xbf16>
    %123 = vector.shape_cast %120 : vector<8x32xbf16> to vector<1x8x32xbf16>
    tpu.vector_store %arg8[%c2_45, %c0_46, %c0_47], %123 {strides = array<i32>} : memref<8x8x32xbf16, #tpu.memory_space<vmem>>, vector<1x8x32xbf16>,
    %c3 = arith.constant 3 : index
    %c0_48 = arith.constant 0 : index
    %c0_49 = arith.constant 0 : index
    %124 = vector.load %arg2[%c3, %c0_48, %c0_49] : memref<8x8x16xbf16, #tpu.memory_space<vmem>>, vector<1x8x16xbf16>
    %125 = vector.shape_cast %124 : vector<1x8x16xbf16> to vector<8x16xbf16>
    %c0_50 = arith.constant 0 : index
    %c0_51 = arith.constant 0 : index
    %126 = vector.load %arg3[%c0_50, %c0_51] : memref<16x128xbf16, #tpu.memory_space<vmem>>, vector<16x128xbf16>
    %cst_52 = arith.constant dense<0.000000e+00> : vector<8x128xf32>
    %127 = tpu.matmul %125, %126, %cst_52 {dimension_numbers = #tpu.dot_dimension_numbers<[1], [0], [0], [1], [0, 0, 1, 1], [], []>} : vector<8x16xbf16>, vector<16x128xbf16>, vector<8x128xf32> -> vector<8x128xf32>
    %128 = arith.truncf %119 : vector<8x32xf32> to vector<8x32xbf16>
    %c0_53 = arith.constant 0 : index
    %c0_54 = arith.constant 0 : index
    %129 = vector.load %arg5[%c0_53, %c0_54] : memref<32x128xbf16, #tpu.memory_space<vmem>>, vector<32x128xbf16>
    %cst_55 = arith.constant dense<0.000000e+00> : vector<8x128xf32>
    %130 = tpu.matmul %128, %129, %cst_55 {dimension_numbers = #tpu.dot_dimension_numbers<[1], [0], [0], [1], [0, 0, 1, 1], [], []>} : vector<8x32xbf16>, vector<32x128xbf16>, vector<8x128xf32> -> vector<8x128xf32>
    %131 = arith.addf %127, %130 : vector<8x128xf32>
    %132 = vector.broadcast %6 : vector<1x128xf32> to vector<8x128xf32>
    %133 = arith.addf %131, %132 : vector<8x128xf32>
    %134 = vector.extract_strided_slice %133 {offsets = [0, 0], sizes = [8, 32], strides = [1, 1]} : vector<8x128xf32> to vector<8x32xf32>
    %135 = arith.negf %134 : vector<8x32xf32>
    %136 = math.exp %135 : vector<8x32xf32>
    %cst_56 = arith.constant 1.000000e+00 : f32
    %137 = vector.broadcast %cst_56 : f32 to vector<8x32xf32>
    %138 = arith.addf %137, %136 : vector<8x32xf32>
    %139 = arith.divf %137, %138 : vector<8x32xf32>
    %140 = vector.extract_strided_slice %133 {offsets = [0, 32], sizes = [8, 32], strides = [1, 1]} : vector<8x128xf32> to vector<8x32xf32>
    %141 = arith.negf %140 : vector<8x32xf32>
    %142 = math.exp %141 : vector<8x32xf32>
    %cst_57 = arith.constant 1.000000e+00 : f32
    %143 = vector.broadcast %cst_57 : f32 to vector<8x32xf32>
    %144 = arith.addf %143, %142 : vector<8x32xf32>
    %145 = arith.divf %143, %144 : vector<8x32xf32>
    %146 = vector.extract_strided_slice %133 {offsets = [0, 64], sizes = [8, 32], strides = [1, 1]} : vector<8x128xf32> to vector<8x32xf32>
    %147 = math.tanh %146 : vector<8x32xf32>
    %148 = vector.extract_strided_slice %133 {offsets = [0, 96], sizes = [8, 32], strides = [1, 1]} : vector<8x128xf32> to vector<8x32xf32>
    %149 = arith.negf %148 : vector<8x32xf32>
    %150 = math.exp %149 : vector<8x32xf32>
    %cst_58 = arith.constant 1.000000e+00 : f32
    %151 = vector.broadcast %cst_58 : f32 to vector<8x32xf32>
    %152 = arith.addf %151, %150 : vector<8x32xf32>
    %153 = arith.divf %151, %152 : vector<8x32xf32>
    %154 = arith.mulf %145, %117 : vector<8x32xf32>
    %155 = arith.mulf %139, %147 : vector<8x32xf32>
    %156 = arith.addf %154, %155 : vector<8x32xf32>
    %157 = math.tanh %156 : vector<8x32xf32>
    %158 = arith.mulf %153, %157 : vector<8x32xf32>
    %159 = arith.truncf %158 : vector<8x32xf32> to vector<8x32xbf16>
    %c3_59 = arith.constant 3 : index
    %c0_60 = arith.constant 0 : index
    %c0_61 = arith.constant 0 : index
    %160 = vector.load %arg8[%c3_59, %c0_60, %c0_61] : memref<8x8x32xbf16, #tpu.memory_space<vmem>>, vector<1x8x32xbf16>
    %161 = vector.shape_cast %160 : vector<1x8x32xbf16> to vector<8x32xbf16>
    %162 = vector.shape_cast %159 : vector<8x32xbf16> to vector<1x8x32xbf16>
    tpu.vector_store %arg8[%c3_59, %c0_60, %c0_61], %162 {strides = array<i32>} : memref<8x8x32xbf16, #tpu.memory_space<vmem>>, vector<1x8x32xbf16>,
    %c4 = arith.constant 4 : index
    %c0_62 = arith.constant 0 : index
    %c0_63 = arith.constant 0 : index
    %163 = vector.load %arg2[%c4, %c0_62, %c0_63] : memref<8x8x16xbf16, #tpu.memory_space<vmem>>, vector<1x8x16xbf16>
    %164 = vector.shape_cast %163 : vector<1x8x16xbf16> to vector<8x16xbf16>
    %c0_64 = arith.constant 0 : index
    %c0_65 = arith.constant 0 : index
    %165 = vector.load %arg3[%c0_64, %c0_65] : memref<16x128xbf16, #tpu.memory_space<vmem>>, vector<16x128xbf16>
    %cst_66 = arith.constant dense<0.000000e+00> : vector<8x128xf32>
    %166 = tpu.matmul %164, %165, %cst_66 {dimension_numbers = #tpu.dot_dimension_numbers<[1], [0], [0], [1], [0, 0, 1, 1], [], []>} : vector<8x16xbf16>, vector<16x128xbf16>, vector<8x128xf32> -> vector<8x128xf32>
    %167 = arith.truncf %158 : vector<8x32xf32> to vector<8x32xbf16>
    %c0_67 = arith.constant 0 : index
    %c0_68 = arith.constant 0 : index
    %168 = vector.load %arg5[%c0_67, %c0_68] : memref<32x128xbf16, #tpu.memory_space<vmem>>, vector<32x128xbf16>
    %cst_69 = arith.constant dense<0.000000e+00> : vector<8x128xf32>
    %169 = tpu.matmul %167, %168, %cst_69 {dimension_numbers = #tpu.dot_dimension_numbers<[1], [0], [0], [1], [0, 0, 1, 1], [], []>} : vector<8x32xbf16>, vector<32x128xbf16>, vector<8x128xf32> -> vector<8x128xf32>
    %170 = arith.addf %166, %169 : vector<8x128xf32>
    %171 = vector.broadcast %6 : vector<1x128xf32> to vector<8x128xf32>
    %172 = arith.addf %170, %171 : vector<8x128xf32>
    %173 = vector.extract_strided_slice %172 {offsets = [0, 0], sizes = [8, 32], strides = [1, 1]} : vector<8x128xf32> to vector<8x32xf32>
    %174 = arith.negf %173 : vector<8x32xf32>
    %175 = math.exp %174 : vector<8x32xf32>
    %cst_70 = arith.constant 1.000000e+00 : f32
    %176 = vector.broadcast %cst_70 : f32 to vector<8x32xf32>
    %177 = arith.addf %176, %175 : vector<8x32xf32>
    %178 = arith.divf %176, %177 : vector<8x32xf32>
    %179 = vector.extract_strided_slice %172 {offsets = [0, 32], sizes = [8, 32], strides = [1, 1]} : vector<8x128xf32> to vector<8x32xf32>
    %180 = arith.negf %179 : vector<8x32xf32>
    %181 = math.exp %180 : vector<8x32xf32>
    %cst_71 = arith.constant 1.000000e+00 : f32
    %182 = vector.broadcast %cst_71 : f32 to vector<8x32xf32>
    %183 = arith.addf %182, %181 : vector<8x32xf32>
    %184 = arith.divf %182, %183 : vector<8x32xf32>
    %185 = vector.extract_strided_slice %172 {offsets = [0, 64], sizes = [8, 32], strides = [1, 1]} : vector<8x128xf32> to vector<8x32xf32>
    %186 = math.tanh %185 : vector<8x32xf32>
    %187 = vector.extract_strided_slice %172 {offsets = [0, 96], sizes = [8, 32], strides = [1, 1]} : vector<8x128xf32> to vector<8x32xf32>
    %188 = arith.negf %187 : vector<8x32xf32>
    %189 = math.exp %188 : vector<8x32xf32>
    %cst_72 = arith.constant 1.000000e+00 : f32
    %190 = vector.broadcast %cst_72 : f32 to vector<8x32xf32>
    %191 = arith.addf %190, %189 : vector<8x32xf32>
    %192 = arith.divf %190, %191 : vector<8x32xf32>
    %193 = arith.mulf %184, %156 : vector<8x32xf32>
    %194 = arith.mulf %178, %186 : vector<8x32xf32>
    %195 = arith.addf %193, %194 : vector<8x32xf32>
    %196 = math.tanh %195 : vector<8x32xf32>
    %197 = arith.mulf %192, %196 : vector<8x32xf32>
    %198 = arith.truncf %197 : vector<8x32xf32> to vector<8x32xbf16>
    %c4_73 = arith.constant 4 : index
    %c0_74 = arith.constant 0 : index
    %c0_75 = arith.constant 0 : index
    %199 = vector.load %arg8[%c4_73, %c0_74, %c0_75] : memref<8x8x32xbf16, #tpu.memory_space<vmem>>, vector<1x8x32xbf16>
    %200 = vector.shape_cast %199 : vector<1x8x32xbf16> to vector<8x32xbf16>
    %201 = vector.shape_cast %198 : vector<8x32xbf16> to vector<1x8x32xbf16>
    tpu.vector_store %arg8[%c4_73, %c0_74, %c0_75], %201 {strides = array<i32>} : memref<8x8x32xbf16, #tpu.memory_space<vmem>>, vector<1x8x32xbf16>,
    %c5 = arith.constant 5 : index
    %c0_76 = arith.constant 0 : index
    %c0_77 = arith.constant 0 : index
    %202 = vector.load %arg2[%c5, %c0_76, %c0_77] : memref<8x8x16xbf16, #tpu.memory_space<vmem>>, vector<1x8x16xbf16>
    %203 = vector.shape_cast %202 : vector<1x8x16xbf16> to vector<8x16xbf16>
    %c0_78 = arith.constant 0 : index
    %c0_79 = arith.constant 0 : index
    %204 = vector.load %arg3[%c0_78, %c0_79] : memref<16x128xbf16, #tpu.memory_space<vmem>>, vector<16x128xbf16>
    %cst_80 = arith.constant dense<0.000000e+00> : vector<8x128xf32>
    %205 = tpu.matmul %203, %204, %cst_80 {dimension_numbers = #tpu.dot_dimension_numbers<[1], [0], [0], [1], [0, 0, 1, 1], [], []>} : vector<8x16xbf16>, vector<16x128xbf16>, vector<8x128xf32> -> vector<8x128xf32>
    %206 = arith.truncf %197 : vector<8x32xf32> to vector<8x32xbf16>
    %c0_81 = arith.constant 0 : index
    %c0_82 = arith.constant 0 : index
    %207 = vector.load %arg5[%c0_81, %c0_82] : memref<32x128xbf16, #tpu.memory_space<vmem>>, vector<32x128xbf16>
    %cst_83 = arith.constant dense<0.000000e+00> : vector<8x128xf32>
    %208 = tpu.matmul %206, %207, %cst_83 {dimension_numbers = #tpu.dot_dimension_numbers<[1], [0], [0], [1], [0, 0, 1, 1], [], []>} : vector<8x32xbf16>, vector<32x128xbf16>, vector<8x128xf32> -> vector<8x128xf32>
    %209 = arith.addf %205, %208 : vector<8x128xf32>
    %210 = vector.broadcast %6 : vector<1x128xf32> to vector<8x128xf32>
    %211 = arith.addf %209, %210 : vector<8x128xf32>
    %212 = vector.extract_strided_slice %211 {offsets = [0, 0], sizes = [8, 32], strides = [1, 1]} : vector<8x128xf32> to vector<8x32xf32>
    %213 = arith.negf %212 : vector<8x32xf32>
    %214 = math.exp %213 : vector<8x32xf32>
    %cst_84 = arith.constant 1.000000e+00 : f32
    %215 = vector.broadcast %cst_84 : f32 to vector<8x32xf32>
    %216 = arith.addf %215, %214 : vector<8x32xf32>
    %217 = arith.divf %215, %216 : vector<8x32xf32>
    %218 = vector.extract_strided_slice %211 {offsets = [0, 32], sizes = [8, 32], strides = [1, 1]} : vector<8x128xf32> to vector<8x32xf32>
    %219 = arith.negf %218 : vector<8x32xf32>
    %220 = math.exp %219 : vector<8x32xf32>
    %cst_85 = arith.constant 1.000000e+00 : f32
    %221 = vector.broadcast %cst_85 : f32 to vector<8x32xf32>
    %222 = arith.addf %221, %220 : vector<8x32xf32>
    %223 = arith.divf %221, %222 : vector<8x32xf32>
    %224 = vector.extract_strided_slice %211 {offsets = [0, 64], sizes = [8, 32], strides = [1, 1]} : vector<8x128xf32> to vector<8x32xf32>
    %225 = math.tanh %224 : vector<8x32xf32>
    %226 = vector.extract_strided_slice %211 {offsets = [0, 96], sizes = [8, 32], strides = [1, 1]} : vector<8x128xf32> to vector<8x32xf32>
    %227 = arith.negf %226 : vector<8x32xf32>
    %228 = math.exp %227 : vector<8x32xf32>
    %cst_86 = arith.constant 1.000000e+00 : f32
    %229 = vector.broadcast %cst_86 : f32 to vector<8x32xf32>
    %230 = arith.addf %229, %228 : vector<8x32xf32>
    %231 = arith.divf %229, %230 : vector<8x32xf32>
    %232 = arith.mulf %223, %195 : vector<8x32xf32>
    %233 = arith.mulf %217, %225 : vector<8x32xf32>
    %234 = arith.addf %232, %233 : vector<8x32xf32>
    %235 = math.tanh %234 : vector<8x32xf32>
    %236 = arith.mulf %231, %235 : vector<8x32xf32>
    %237 = arith.truncf %236 : vector<8x32xf32> to vector<8x32xbf16>
    %c5_87 = arith.constant 5 : index
    %c0_88 = arith.constant 0 : index
    %c0_89 = arith.constant 0 : index
    %238 = vector.load %arg8[%c5_87, %c0_88, %c0_89] : memref<8x8x32xbf16, #tpu.memory_space<vmem>>, vector<1x8x32xbf16>
    %239 = vector.shape_cast %238 : vector<1x8x32xbf16> to vector<8x32xbf16>
    %240 = vector.shape_cast %237 : vector<8x32xbf16> to vector<1x8x32xbf16>
    tpu.vector_store %arg8[%c5_87, %c0_88, %c0_89], %240 {strides = array<i32>} : memref<8x8x32xbf16, #tpu.memory_space<vmem>>, vector<1x8x32xbf16>,
    %c6 = arith.constant 6 : index
    %c0_90 = arith.constant 0 : index
    %c0_91 = arith.constant 0 : index
    %241 = vector.load %arg2[%c6, %c0_90, %c0_91] : memref<8x8x16xbf16, #tpu.memory_space<vmem>>, vector<1x8x16xbf16>
    %242 = vector.shape_cast %241 : vector<1x8x16xbf16> to vector<8x16xbf16>
    %c0_92 = arith.constant 0 : index
    %c0_93 = arith.constant 0 : index
    %243 = vector.load %arg3[%c0_92, %c0_93] : memref<16x128xbf16, #tpu.memory_space<vmem>>, vector<16x128xbf16>
    %cst_94 = arith.constant dense<0.000000e+00> : vector<8x128xf32>
    %244 = tpu.matmul %242, %243, %cst_94 {dimension_numbers = #tpu.dot_dimension_numbers<[1], [0], [0], [1], [0, 0, 1, 1], [], []>} : vector<8x16xbf16>, vector<16x128xbf16>, vector<8x128xf32> -> vector<8x128xf32>
    %245 = arith.truncf %236 : vector<8x32xf32> to vector<8x32xbf16>
    %c0_95 = arith.constant 0 : index
    %c0_96 = arith.constant 0 : index
    %246 = vector.load %arg5[%c0_95, %c0_96] : memref<32x128xbf16, #tpu.memory_space<vmem>>, vector<32x128xbf16>
    %cst_97 = arith.constant dense<0.000000e+00> : vector<8x128xf32>
    %247 = tpu.matmul %245, %246, %cst_97 {dimension_numbers = #tpu.dot_dimension_numbers<[1], [0], [0], [1], [0, 0, 1, 1], [], []>} : vector<8x32xbf16>, vector<32x128xbf16>, vector<8x128xf32> -> vector<8x128xf32>
    %248 = arith.addf %244, %247 : vector<8x128xf32>
    %249 = vector.broadcast %6 : vector<1x128xf32> to vector<8x128xf32>
    %250 = arith.addf %248, %249 : vector<8x128xf32>
    %251 = vector.extract_strided_slice %250 {offsets = [0, 0], sizes = [8, 32], strides = [1, 1]} : vector<8x128xf32> to vector<8x32xf32>
    %252 = arith.negf %251 : vector<8x32xf32>
    %253 = math.exp %252 : vector<8x32xf32>
    %cst_98 = arith.constant 1.000000e+00 : f32
    %254 = vector.broadcast %cst_98 : f32 to vector<8x32xf32>
    %255 = arith.addf %254, %253 : vector<8x32xf32>
    %256 = arith.divf %254, %255 : vector<8x32xf32>
    %257 = vector.extract_strided_slice %250 {offsets = [0, 32], sizes = [8, 32], strides = [1, 1]} : vector<8x128xf32> to vector<8x32xf32>
    %258 = arith.negf %257 : vector<8x32xf32>
    %259 = math.exp %258 : vector<8x32xf32>
    %cst_99 = arith.constant 1.000000e+00 : f32
    %260 = vector.broadcast %cst_99 : f32 to vector<8x32xf32>
    %261 = arith.addf %260, %259 : vector<8x32xf32>
    %262 = arith.divf %260, %261 : vector<8x32xf32>
    %263 = vector.extract_strided_slice %250 {offsets = [0, 64], sizes = [8, 32], strides = [1, 1]} : vector<8x128xf32> to vector<8x32xf32>
    %264 = math.tanh %263 : vector<8x32xf32>
    %265 = vector.extract_strided_slice %250 {offsets = [0, 96], sizes = [8, 32], strides = [1, 1]} : vector<8x128xf32> to vector<8x32xf32>
    %266 = arith.negf %265 : vector<8x32xf32>
    %267 = math.exp %266 : vector<8x32xf32>
    %cst_100 = arith.constant 1.000000e+00 : f32
    %268 = vector.broadcast %cst_100 : f32 to vector<8x32xf32>
    %269 = arith.addf %268, %267 : vector<8x32xf32>
    %270 = arith.divf %268, %269 : vector<8x32xf32>
    %271 = arith.mulf %262, %234 : vector<8x32xf32>
    %272 = arith.mulf %256, %264 : vector<8x32xf32>
    %273 = arith.addf %271, %272 : vector<8x32xf32>
    %274 = math.tanh %273 : vector<8x32xf32>
    %275 = arith.mulf %270, %274 : vector<8x32xf32>
    %276 = arith.truncf %275 : vector<8x32xf32> to vector<8x32xbf16>
    %c6_101 = arith.constant 6 : index
    %c0_102 = arith.constant 0 : index
    %c0_103 = arith.constant 0 : index
    %277 = vector.load %arg8[%c6_101, %c0_102, %c0_103] : memref<8x8x32xbf16, #tpu.memory_space<vmem>>, vector<1x8x32xbf16>
    %278 = vector.shape_cast %277 : vector<1x8x32xbf16> to vector<8x32xbf16>
    %279 = vector.shape_cast %276 : vector<8x32xbf16> to vector<1x8x32xbf16>
    tpu.vector_store %arg8[%c6_101, %c0_102, %c0_103], %279 {strides = array<i32>} : memref<8x8x32xbf16, #tpu.memory_space<vmem>>, vector<1x8x32xbf16>,
    %c7 = arith.constant 7 : index
    %c0_104 = arith.constant 0 : index
    %c0_105 = arith.constant 0 : index
    %280 = vector.load %arg2[%c7, %c0_104, %c0_105] : memref<8x8x16xbf16, #tpu.memory_space<vmem>>, vector<1x8x16xbf16>
    %281 = vector.shape_cast %280 : vector<1x8x16xbf16> to vector<8x16xbf16>
    %c0_106 = arith.constant 0 : index
    %c0_107 = arith.constant 0 : index
    %282 = vector.load %arg3[%c0_106, %c0_107] : memref<16x128xbf16, #tpu.memory_space<vmem>>, vector<16x128xbf16>
    %cst_108 = arith.constant dense<0.000000e+00> : vector<8x128xf32>
    %283 = tpu.matmul %281, %282, %cst_108 {dimension_numbers = #tpu.dot_dimension_numbers<[1], [0], [0], [1], [0, 0, 1, 1], [], []>} : vector<8x16xbf16>, vector<16x128xbf16>, vector<8x128xf32> -> vector<8x128xf32>
    %284 = arith.truncf %275 : vector<8x32xf32> to vector<8x32xbf16>
    %c0_109 = arith.constant 0 : index
    %c0_110 = arith.constant 0 : index
    %285 = vector.load %arg5[%c0_109, %c0_110] : memref<32x128xbf16, #tpu.memory_space<vmem>>, vector<32x128xbf16>
    %cst_111 = arith.constant dense<0.000000e+00> : vector<8x128xf32>
    %286 = tpu.matmul %284, %285, %cst_111 {dimension_numbers = #tpu.dot_dimension_numbers<[1], [0], [0], [1], [0, 0, 1, 1], [], []>} : vector<8x32xbf16>, vector<32x128xbf16>, vector<8x128xf32> -> vector<8x128xf32>
    %287 = arith.addf %283, %286 : vector<8x128xf32>
    %288 = vector.broadcast %6 : vector<1x128xf32> to vector<8x128xf32>
    %289 = arith.addf %287, %288 : vector<8x128xf32>
    %290 = vector.extract_strided_slice %289 {offsets = [0, 0], sizes = [8, 32], strides = [1, 1]} : vector<8x128xf32> to vector<8x32xf32>
    %291 = arith.negf %290 : vector<8x32xf32>
    %292 = math.exp %291 : vector<8x32xf32>
    %cst_112 = arith.constant 1.000000e+00 : f32
    %293 = vector.broadcast %cst_112 : f32 to vector<8x32xf32>
    %294 = arith.addf %293, %292 : vector<8x32xf32>
    %295 = arith.divf %293, %294 : vector<8x32xf32>
    %296 = vector.extract_strided_slice %289 {offsets = [0, 32], sizes = [8, 32], strides = [1, 1]} : vector<8x128xf32> to vector<8x32xf32>
    %297 = arith.negf %296 : vector<8x32xf32>
    %298 = math.exp %297 : vector<8x32xf32>
    %cst_113 = arith.constant 1.000000e+00 : f32
    %299 = vector.broadcast %cst_113 : f32 to vector<8x32xf32>
    %300 = arith.addf %299, %298 : vector<8x32xf32>
    %301 = arith.divf %299, %300 : vector<8x32xf32>
    %302 = vector.extract_strided_slice %289 {offsets = [0, 64], sizes = [8, 32], strides = [1, 1]} : vector<8x128xf32> to vector<8x32xf32>
    %303 = math.tanh %302 : vector<8x32xf32>
    %304 = vector.extract_strided_slice %289 {offsets = [0, 96], sizes = [8, 32], strides = [1, 1]} : vector<8x128xf32> to vector<8x32xf32>
    %305 = arith.negf %304 : vector<8x32xf32>
    %306 = math.exp %305 : vector<8x32xf32>
    %cst_114 = arith.constant 1.000000e+00 : f32
    %307 = vector.broadcast %cst_114 : f32 to vector<8x32xf32>
    %308 = arith.addf %307, %306 : vector<8x32xf32>
    %309 = arith.divf %307, %308 : vector<8x32xf32>
    %310 = arith.mulf %301, %273 : vector<8x32xf32>
    %311 = arith.mulf %295, %303 : vector<8x32xf32>
    %312 = arith.addf %310, %311 : vector<8x32xf32>
    %313 = math.tanh %312 : vector<8x32xf32>
    %314 = arith.mulf %309, %313 : vector<8x32xf32>
    %315 = arith.truncf %314 : vector<8x32xf32> to vector<8x32xbf16>
    %c7_115 = arith.constant 7 : index
    %c0_116 = arith.constant 0 : index
    %c0_117 = arith.constant 0 : index
    %316 = vector.load %arg8[%c7_115, %c0_116, %c0_117] : memref<8x8x32xbf16, #tpu.memory_space<vmem>>, vector<1x8x32xbf16>
    %317 = vector.shape_cast %316 : vector<1x8x32xbf16> to vector<8x32xbf16>
    %318 = vector.shape_cast %315 : vector<8x32xbf16> to vector<1x8x32xbf16>
    tpu.vector_store %arg8[%c7_115, %c0_116, %c0_117], %318 {strides = array<i32>} : memref<8x8x32xbf16, #tpu.memory_space<vmem>>, vector<1x8x32xbf16>,
    %c0_118 = arith.constant 0 : index
    %c0_119 = arith.constant 0 : index
    %319 = vector.load %arg10[%c0_118, %c0_119] : memref<8x32xf32, #tpu.memory_space<vmem>>, vector<8x32xf32>
    tpu.vector_store %arg10[%c0_118, %c0_119], %314 {strides = array<i32>} : memref<8x32xf32, #tpu.memory_space<vmem>>, vector<8x32xf32>,
    %c0_120 = arith.constant 0 : index
    %c0_121 = arith.constant 0 : index
    %320 = vector.load %arg11[%c0_120, %c0_121] : memref<8x32xf32, #tpu.memory_space<vmem>>, vector<8x32xf32>
    tpu.vector_store %arg11[%c0_120, %c0_121], %312 {strides = array<i32>} : memref<8x32xf32, #tpu.memory_space<vmem>>, vector<8x32xf32>,
    %c0_i32_122 = arith.constant 0 : i32
    %321 = arith.cmpi eq, %arg1, %c0_i32_122 : i32
    %322 = arith.extui %321 : i1 to i32
    %c0_i32_123 = arith.constant 0 : i32
    %323 = arith.cmpi ne, %322, %c0_i32_123 : i32
    scf.if %323 {
      %324 = arith.truncf %312 : vector<8x32xf32> to vector<8x32xbf16>
      %c0_124 = arith.constant 0 : index
      %c0_125 = arith.constant 0 : index
      %325 = vector.load %arg9[%c0_124, %c0_125] : memref<8x32xbf16, #tpu.memory_space<vmem>>, vector<8x32xbf16>
      tpu.vector_store %arg9[%c0_124, %c0_125], %324 {strides = array<i32>} : memref<8x32xbf16, #tpu.memory_space<vmem>>, vector<8x32xbf16>,
    } else {
    }
    return
  }
  func.func @transform_0(%arg0: i32, %arg1: i32) -> (i32, i32, i32) {
    %c0_i32 = arith.constant 0 : i32
    %c0_i32_0 = arith.constant 0 : i32
    return %arg1, %arg0, %c0_i32 : i32, i32, i32
  }
  func.func @transform_1(%arg0: i32, %arg1: i32) -> (i32, i32) {
    %c0_i32 = arith.constant 0 : i32
    %c0_i32_0 = arith.constant 0 : i32
    %c0_i32_1 = arith.constant 0 : i32
    return %c0_i32, %c0_i32_0 : i32, i32
  }
  func.func @transform_2(%arg0: i32, %arg1: i32) -> (i32, i32) {
    %c0_i32 = arith.constant 0 : i32
    %c0_i32_0 = arith.constant 0 : i32
    %c0_i32_1 = arith.constant 0 : i32
    return %c0_i32, %c0_i32_0 : i32, i32
  }
  func.func @transform_3(%arg0: i32, %arg1: i32) -> (i32, i32) {
    %c0_i32 = arith.constant 0 : i32
    %c0_i32_0 = arith.constant 0 : i32
    %c0_i32_1 = arith.constant 0 : i32
    return %c0_i32, %c0_i32_0 : i32, i32
  }
  func.func @transform_4(%arg0: i32, %arg1: i32) -> (i32, i32) {
    %c0_i32 = arith.constant 0 : i32
    %c0_i32_0 = arith.constant 0 : i32
    return %arg0, %c0_i32 : i32, i32
  }
  func.func @transform_5(%arg0: i32, %arg1: i32) -> (i32, i32) {
    %c0_i32 = arith.constant 0 : i32
    %c0_i32_0 = arith.constant 0 : i32
    return %arg0, %c0_i32 : i32, i32
  }
  func.func @transform_6(%arg0: i32, %arg1: i32) -> (i32, i32, i32) {
    %c0_i32 = arith.constant 0 : i32
    %c0_i32_0 = arith.constant 0 : i32
    return %arg1, %arg0, %c0_i32 : i32, i32, i32
  }
  func.func @transform_7(%arg0: i32, %arg1: i32) -> (i32, i32) {
    %c0_i32 = arith.constant 0 : i32
    %c0_i32_0 = arith.constant 0 : i32
    return %arg0, %c0_i32 : i32, i32
  }
}

</mosaic_0001>

<llo_original>
// kernel: tpu_custom_call.1
$region0: #{tpu_custom_call.1}
  #allocation0 [shape = 'u32[]', space=smem, size = 0x4, offset = 0x4, fixed_abs, tag = 'smem constant byte address 0x4 - core index']
  #allocation1 [shape = 'u32[144,128]{1,0:T(1,128)}', space=vmem, size = 0x12000, scoped, tag = 'internal scratch']
  #allocation2 [shape = 'f32[8,32]{1,0:T(8,128)}', space=vmem, size = 0x1000, scoped, tag = 'scratch operand']
  #allocation3 [shape = 'f32[8,32]{1,0:T(8,128)}', space=vmem, size = 0x1000, scoped, tag = 'scratch operand']
  %s0 = inlined_call_operand.hbm [shape: bf16[8,8,16], index: 0, kind: input, shape index: {}]
  %s1 = inlined_call_operand.hbm [shape: bf16[16,128], index: 1, kind: input, shape index: {}]
  %s2 = inlined_call_operand.vmem [shape: bf16[1,128], index: 2, kind: input, shape index: {}]
  %s3 = inlined_call_operand.hbm [shape: bf16[32,128], index: 3, kind: input, shape index: {}]
  %s4 = inlined_call_operand.vmem [shape: bf16[8,32], index: 4, kind: input, shape index: {}]
  %s5 = inlined_call_operand.vmem [shape: bf16[8,32], index: 5, kind: input, shape index: {}]
  %s6 = inlined_call_operand.hbm [shape: bf16[8,8,32], index: 6, kind: output, shape index: {0}]
  %s7 = inlined_call_operand.hbm [shape: bf16[8,32], index: 7, kind: output, shape index: {1}]
  %8 = xla_tuple %s6, %s7
  %s9 = sld [smem:[#allocation0]]
  $region62: #{tpu_custom_call.1} parent=0
    _
  %s11 = ssub.s32 1, %s9
  %s12 = scalar_select 0, %s11, %s9
  $region1: #{tpu_custom_call.1} parent=0
    #allocation4 [shape = 'u8[16384]{0}', space=vmem, size = 0x4000, scoped, tag = 'input window, operand 0, single buffered']
    #allocation5 [shape = 's32[1]{0}', space=sflag, size = 0x4, scoped, tag = 'scoped memory for tpu_custom_call.1']
    #allocation6 [shape = 's32[1]{0}', space=sflag, size = 0x4, scoped, tag = 'scoped memory for tpu_custom_call.1']
    #allocation7 [shape = 'u8[4096]{0}', space=vmem, size = 0x1000, scoped, tag = 'input window, operand 1, single buffered']
    #allocation8 [shape = 's32[1]{0}', space=sflag, size = 0x4, scoped, tag = 'scoped memory for tpu_custom_call.1']
    #allocation9 [shape = 'u8[8192]{0}', space=vmem, size = 0x2000, scoped, tag = 'input window, operand 3, single buffered']
    #allocation10 [shape = 'u8[16384]{0}', space=vmem, size = 0x4000, scoped, tag = 'output window, operand 0, single buffered']
    #allocation11 [shape = 'u8[2048]{0}', space=vmem, size = 0x800, scoped, tag = 'output window, operand 1, single buffered']
    #allocation12 [shape = 's32[1]{0}', space=sflag, size = 0x4, scoped, tag = 'scoped memory for tpu_custom_call.1']
    %13 = vsyncpa [#allocation5], 0
    %14 = vsyncpa [#allocation8], 0
    %15 = vsyncpa [#allocation6], 0
    %16 = vsyncpa [#allocation12], 0
    // Predicated region
    $region2: #{tpu_custom_call.1} parent=1 // pred_check
      _
    $region3: #{tpu_custom_call.1} parent=1 // pred_check_branch
      %18 = sbr.rel (0) target = $region5
    $region4: #{tpu_custom_call.1} parent=1 // pred_region
      %s20 = ssub.s32 512, 512
      %21 = vsyncadd [#allocation5], %s20
      %s22 = sshll.u32 [#allocation4], 4
      %s23 = int_to_ptr.vmem [resolvable:$true] %s22
      %28 = dma.hbm_to_vmem [thread:$0]  %s0, 512, %s23, [#allocation5], 64, 64, 4
    $region5: #{tpu_custom_call.1} parent=1 // pred_fallthru
      _
    // Predicated region
    $region6: #{tpu_custom_call.1} parent=1 // pred_check
      _
    $region7: #{tpu_custom_call.1} parent=1 // pred_check_branch
      %30 = sbr.rel (0) target = $region9
    $region8: #{tpu_custom_call.1} parent=1 // pred_region
      %s32 = ssub.s32 128, 128
      %33 = vsyncadd [#allocation8], %s32
      %s34 = sshll.u32 [#allocation7], 4
      %s35 = int_to_ptr.vmem [resolvable:$true] %s34
      %40 = dma.hbm_to_vmem [thread:$0]  %s1, 128, %s35, [#allocation8], 64, 64, 4
    $region9: #{tpu_custom_call.1} parent=1 // pred_fallthru
      _
    // Predicated region
    $region10: #{tpu_custom_call.1} parent=1 // pred_check
      _
    $region11: #{tpu_custom_call.1} parent=1 // pred_check_branch
      %42 = sbr.rel (0) target = $region13
    $region12: #{tpu_custom_call.1} parent=1 // pred_region
      _
    $region13: #{tpu_custom_call.1} parent=1 // pred_fallthru
      _
    // Predicated region
    $region14: #{tpu_custom_call.1} parent=1 // pred_check
      _
    $region15: #{tpu_custom_call.1} parent=1 // pred_check_branch
      %44 = sbr.rel (0) target = $region17
    $region16: #{tpu_custom_call.1} parent=1 // pred_region
      %s46 = ssub.s32 256, 256
      %47 = vsyncadd [#allocation8], %s46
      %s48 = sshll.u32 [#allocation9], 4
      %s49 = int_to_ptr.vmem [resolvable:$true] %s48
      %54 = dma.hbm_to_vmem [thread:$0]  %s3, 256, %s49, [#allocation8], 64, 64, 4
    $region17: #{tpu_custom_call.1} parent=1 // pred_fallthru
      _
    // Predicated region
    $region18: #{tpu_custom_call.1} parent=1 // pred_check
      _
    $region19: #{tpu_custom_call.1} parent=1 // pred_check_branch
      %56 = sbr.rel (0) target = $region21
    $region20: #{tpu_custom_call.1} parent=1 // pred_region
      _
    $region21: #{tpu_custom_call.1} parent=1 // pred_fallthru
      _
    // Predicated region
    $region22: #{tpu_custom_call.1} parent=1 // pred_check
      _
    $region23: #{tpu_custom_call.1} parent=1 // pred_check_branch
      %58 = sbr.rel (0) target = $region25
    $region24: #{tpu_custom_call.1} parent=1 // pred_region
      _
    $region25: #{tpu_custom_call.1} parent=1 // pred_fallthru
      _
    // Predicated region
    $region26: #{tpu_custom_call.1} parent=1 // pred_check
      _
    $region27: #{tpu_custom_call.1} parent=1 // pred_check_branch
      %60 = sbr.rel (0) target = $region29
    $region28: #{tpu_custom_call.1} parent=1 // pred_region
      %61 = dma.done [#allocation5], 512
    $region29: #{tpu_custom_call.1} parent=1 // pred_fallthru
      _
    // Predicated region
    $region30: #{tpu_custom_call.1} parent=1 // pred_check
      _
    $region31: #{tpu_custom_call.1} parent=1 // pred_check_branch
      %63 = sbr.rel (0) target = $region33
    $region32: #{tpu_custom_call.1} parent=1 // pred_region
      %64 = dma.done [#allocation8], 128
    $region33: #{tpu_custom_call.1} parent=1 // pred_fallthru
      _
    // Predicated region
    $region34: #{tpu_custom_call.1} parent=1 // pred_check
      _
    $region35: #{tpu_custom_call.1} parent=1 // pred_check_branch
      %66 = sbr.rel (0) target = $region37
    $region36: #{tpu_custom_call.1} parent=1 // pred_region
      %67 = dma.done [#allocation8], 256
    $region37: #{tpu_custom_call.1} parent=1 // pred_fallthru
      _
    %p69 = scmp.eq.s32.totalorder 0, 0
    // Predicated region
    $region38: #{tpu_custom_call.1} parent=1 // pred_check
      %p70 = pneg %p69
    $region39: #{tpu_custom_call.1} parent=1 // pred_check_branch
      %72 = sbr.rel (%p70) target = $region41
    $region40: #{tpu_custom_call.1} parent=1 // pred_region
      %v73 = vld [vmem:[%s4] sm:$0xf]
      %v74 = vunpack.c.l.bf16 %v73
      %vm75 = vcmask 261120
      %76 = vst.msk [vmem:[#allocation2] sm:$0xff] %vm75, %v74
      %v77 = vld [vmem:[%s5] sm:$0xf]
      %v78 = vunpack.c.l.bf16 %v77
      %79 = vst.msk [vmem:[#allocation3] sm:$0xff] %vm75, %v78
    $region41: #{tpu_custom_call.1} parent=1 // pred_fallthru
      _
    %v80 = vld [vmem:[#allocation2] sm:$0xff]
    %v81 = vld [vmem:[#allocation3] sm:$0xff]
    %v82 = vld [vmem:[%s2] sm:$0x1]
    %v83 = vunpack.c.l.bf16 %v82
    %v84 = vld [vmem:[#allocation4] sm:$0xf]
    %v85 = vld [vmem:[#allocation7] sm:$0xf]
    %v86 = vld [vmem:[#allocation7 + $0x4] sm:$0xf]
    %v87 = vpack.c.bf16 %v80, %v80
    %v88 = vld [vmem:[#allocation9] sm:$0xf]
    %v89 = vld [vmem:[#allocation9 + $0x4] sm:$0xf]
    %v90 = vld [vmem:[#allocation9 + $0x8] sm:$0xf]
    %v91 = vld [vmem:[#allocation9 + $0xc] sm:$0xf]
    %v96 = vunpack.c.l.b16 %v88
    %v97 = vunpack.c.l.b16 %v89
    %v98 = vunpack.c.l.b16 %v90
    %v99 = vunpack.c.l.b16 %v91
    %v100 = vpack.c.b16 %v97, %v96
    %v101 = vpack.c.b16 %v99, %v98
    %vm104 = vcmask 261120
    %v106 = vsel %vm104, %v87, 0
    %108 = vmatprep.subr.bf16.mxu0 0
    %109 = vmatpush1.bf16.msra.mxu0 0
    %110 = vmatprep.subr.bf16.mxu0 0
    %111 = vmatpush1.bf16.msra.mxu0 0
    %112 = vmatprep.subr.bf16.mxu0 0
    %113 = vmatpush1.bf16.msra.mxu0 0
    %114 = vmatprep.subr.bf16.mxu0 0
    %115 = vmatpush1.bf16.msra.mxu0 0
    %116 = vmatprep.subr.bf16.mxu0 0
    %117 = vmatpush1.bf16.msra.mxu0 0
    %118 = vmatprep.subr.bf16.mxu0 0
    %119 = vmatpush1.bf16.msra.mxu0 0
    %120 = vmatprep.subr.bf16.mxu0 0
    %121 = vmatpush1.bf16.msra.mxu0 %v101
    %122 = vmatprep.subr.bf16.mxu0 0
    %123 = vmatpush1.bf16.msra.mxu0 %v100
    %124 = vmatprep.subr.bf16.mxu0 0
    %125 = vmatpush2.bf16.msra.mxu0 0
    %126 = vmatprep.subr.bf16.mxu0 0
    %127 = vmatpush2.bf16.msra.mxu0 0
    %128 = vmatprep.subr.bf16.mxu0 0
    %129 = vmatpush2.bf16.msra.mxu0 0
    %130 = vmatprep.subr.bf16.mxu0 0
    %131 = vmatpush2.bf16.msra.mxu0 0
    %132 = vmatprep.subr.bf16.mxu0 0
    %133 = vmatpush2.bf16.msra.mxu0 0
    %134 = vmatprep.subr.bf16.mxu0 0
    %135 = vmatpush2.bf16.msra.mxu0 0
    %136 = vmatprep.subr.bf16.mxu0 0
    %137 = vmatpush2.bf16.msra.mxu0 0
    %138 = vmatprep.subr.bf16.mxu0 0
    %139 = vmatpush2.bf16.msra.mxu0 0
    %140 = vmatprep.mubr.bf16.mxu0 0
    %141 = vmatmul.mubr.bf16.gmra.mxu0 %v106
    %v142 = vpop.f32.mrf.mxu0
    %v143 = vadd.f32 0.0, %v142
    %v144 = vpop.f32.mrf.mxu0
    %v145 = vpop.f32.mrf.mxu0
    %v146 = vpop.f32.mrf.mxu0
    %147 = vdwg.mxu0
    %v150 = vunpack.c.l.b16 %v85
    %v151 = vunpack.c.l.b16 %v86
    %v152 = vpack.c.b16 %v151, %v150
    %vm154 = vcmask 130048
    %v156 = vsel %vm154, %v84, 0
    %158 = vmatprep.subr.bf16.mxu0 0
    %159 = vmatpush1.bf16.msra.mxu0 0
    %160 = vmatprep.subr.bf16.mxu0 0
    %161 = vmatpush1.bf16.msra.mxu0 0
    %162 = vmatprep.subr.bf16.mxu0 0
    %163 = vmatpush1.bf16.msra.mxu0 0
    %164 = vmatprep.subr.bf16.mxu0 0
    %165 = vmatpush1.bf16.msra.mxu0 0
    %166 = vmatprep.subr.bf16.mxu0 0
    %167 = vmatpush1.bf16.msra.mxu0 0
    %168 = vmatprep.subr.bf16.mxu0 0
    %169 = vmatpush1.bf16.msra.mxu0 0
    %170 = vmatprep.subr.bf16.mxu0 0
    %171 = vmatpush1.bf16.msra.mxu0 0
    %172 = vmatprep.subr.bf16.mxu0 0
    %173 = vmatpush1.bf16.msra.mxu0 %v152
    %174 = vmatprep.subr.bf16.mxu0 0
    %175 = vmatpush2.bf16.msra.mxu0 0
    %176 = vmatprep.subr.bf16.mxu0 0
    %177 = vmatpush2.bf16.msra.mxu0 0
    %178 = vmatprep.subr.bf16.mxu0 0
    %179 = vmatpush2.bf16.msra.mxu0 0
    %180 = vmatprep.subr.bf16.mxu0 0
    %181 = vmatpush2.bf16.msra.mxu0 0
    %182 = vmatprep.subr.bf16.mxu0 0
    %183 = vmatpush2.bf16.msra.mxu0 0
    %184 = vmatprep.subr.bf16.mxu0 0
    %185 = vmatpush2.bf16.msra.mxu0 0
    %186 = vmatprep.subr.bf16.mxu0 0
    %187 = vmatpush2.bf16.msra.mxu0 0
    %188 = vmatprep.subr.bf16.mxu0 0
    %189 = vmatpush2.bf16.msra.mxu0 0
    %190 = vmatprep.mubr.bf16.mxu0 0
    %191 = vmatmul.mubr.bf16.gmra.mxu0 %v156
    %v192 = vpop.f32.mrf.mxu0
    %v193 = vadd.f32 %v143, %v192
    %v194 = vpop.f32.mrf.mxu0
    %v195 = vpop.f32.mrf.mxu0
    %v196 = vpop.f32.mrf.mxu0
    %197 = vdwg.mxu0
    %v198 = vlaneseq
    %v199 = vshrl.u32 %v198, 7
    %v200 = vsub.s32 0, %v199
    %v201 = vrot.slane %v83, %v200
    %v202 = vadd.f32 %v193, %v201
    %v203 = vxor.u32 %v202, 2147483648
    %v204 = vmul.f32 %v203, 1.442695
    %v205 = vpow.pop %v204
    %v206 = vadd.f32 %v205, 1.0
    %v207 = vrcp.pop %v206
    %v208 = vmul.f32 1.0, %v207
    %v209 = vtanh.pop %v202
    %211 = vrot.lane.b32.xlu0 %v81, 32
    %v212 = vpop.permute.xlu0 %211
    %v214 = vmul.f32 %v208, %v212
    %216 = vrot.lane.b32.xlu0 %v209, 64
    %v217 = vpop.permute.xlu0 %216
    %v219 = vmul.f32 %v208, %v217
    %221 = vrot.lane.b32.xlu0 %v219, 32
    %v222 = vpop.permute.xlu0 %221
    %v224 = vadd.f32 %v214, %v222
    %v225 = vtanh.pop %v224
    %227 = vrot.lane.b32.xlu0 %v225, 64
    %v228 = vpop.permute.xlu0 %227
    %v230 = vmul.f32 %v208, %v228
    %v231 = vpack.c.bf16 %v230, %v230
    %v233 = vunpack.c.l.b16 %v231
    %v234 = vpack.c.b16 %v233, %v233
    %235 = vrot.lane.b32.xlu0 %v234, 32
    %v236 = vpop.permute.xlu0 %235
    %vm238 = vcmask 257024
    %239 = vst.msk [vmem:[#allocation10] sm:$0xf] %vm238, %v236
    %s240 = scalar_lea.vmem [#allocation4], 4
    %v241 = vld [vmem:[%s240] sm:$0xf]
    %v242 = vld [vmem:[#allocation7] sm:$0xf]
    %v243 = vld [vmem:[#allocation7 + $0x4] sm:$0xf]
    %v244 = vld [vmem:[#allocation9] sm:$0xf]
    %v245 = vld [vmem:[#allocation9 + $0x4] sm:$0xf]
    %v246 = vld [vmem:[#allocation9 + $0x8] sm:$0xf]
    %v247 = vld [vmem:[#allocation9 + $0xc] sm:$0xf]
    %248 = vrot.lane.b32.xlu0 %v231, 32
    %v249 = vpop.permute.xlu0 %248
    %v254 = vunpack.c.l.b16 %v244
    %v255 = vunpack.c.l.b16 %v245
    %v256 = vunpack.c.l.b16 %v246
    %v257 = vunpack.c.l.b16 %v247
    %v258 = vpack.c.b16 %v255, %v254
    %v259 = vpack.c.b16 %v257, %v256
    %v263 = vsel %vm104, %v249, 0
    %265 = vmatprep.subr.bf16.mxu0 0
    %266 = vmatpush1.bf16.msra.mxu0 0
    %267 = vmatprep.subr.bf16.mxu0 0
    %268 = vmatpush1.bf16.msra.mxu0 0
    %269 = vmatprep.subr.bf16.mxu0 0
    %270 = vmatpush1.bf16.msra.mxu0 0
    %271 = vmatprep.subr.bf16.mxu0 0
    %272 = vmatpush1.bf16.msra.mxu0 0
    %273 = vmatprep.subr.bf16.mxu0 0
    %274 = vmatpush1.bf16.msra.mxu0 0
    %275 = vmatprep.subr.bf16.mxu0 0
    %276 = vmatpush1.bf16.msra.mxu0 0
    %277 = vmatprep.subr.bf16.mxu0 0
    %278 = vmatpush1.bf16.msra.mxu0 %v259
    %279 = vmatprep.subr.bf16.mxu0 0
    %280 = vmatpush1.bf16.msra.mxu0 %v258
    %281 = vmatprep.subr.bf16.mxu0 0
    %282 = vmatpush2.bf16.msra.mxu0 0
    %283 = vmatprep.subr.bf16.mxu0 0
    %284 = vmatpush2.bf16.msra.mxu0 0
    %285 = vmatprep.subr.bf16.mxu0 0
    %286 = vmatpush2.bf16.msra.mxu0 0
    %287 = vmatprep.subr.bf16.mxu0 0
    %288 = vmatpush2.bf16.msra.mxu0 0
    %289 = vmatprep.subr.bf16.mxu0 0
    %290 = vmatpush2.bf16.msra.mxu0 0
    %291 = vmatprep.subr.bf16.mxu0 0
    %292 = vmatpush2.bf16.msra.mxu0 0
    %293 = vmatprep.subr.bf16.mxu0 0
    %294 = vmatpush2.bf16.msra.mxu0 0
    %295 = vmatprep.subr.bf16.mxu0 0
    %296 = vmatpush2.bf16.msra.mxu0 0
    %297 = vmatprep.mubr.bf16.mxu0 0
    %298 = vmatmul.mubr.bf16.gmra.mxu0 %v263
    %v299 = vpop.f32.mrf.mxu0
    %v300 = vadd.f32 0.0, %v299
    %v301 = vpop.f32.mrf.mxu0
    %v302 = vpop.f32.mrf.mxu0
    %v303 = vpop.f32.mrf.mxu0
    %304 = vdwg.mxu0
    %v307 = vunpack.c.l.b16 %v242
    %v308 = vunpack.c.l.b16 %v243
    %v309 = vpack.c.b16 %v308, %v307
    %v312 = vsel %vm154, %v241, 0
    %314 = vmatprep.subr.bf16.mxu0 0
    %315 = vmatpush1.bf16.msra.mxu0 0
    %316 = vmatprep.subr.bf16.mxu0 0
    %317 = vmatpush1.bf16.msra.mxu0 0
    %318 = vmatprep.subr.bf16.mxu0 0
    %319 = vmatpush1.bf16.msra.mxu0 0
    %320 = vmatprep.subr.bf16.mxu0 0
    %321 = vmatpush1.bf16.msra.mxu0 0
    %322 = vmatprep.subr.bf16.mxu0 0
    %323 = vmatpush1.bf16.msra.mxu0 0
    %324 = vmatprep.subr.bf16.mxu0 0
    %325 = vmatpush1.bf16.msra.mxu0 0
    %326 = vmatprep.subr.bf16.mxu0 0
    %327 = vmatpush1.bf16.msra.mxu0 0
    %328 = vmatprep.subr.bf16.mxu0 0
    %329 = vmatpush1.bf16.msra.mxu0 %v309
    %330 = vmatprep.subr.bf16.mxu0 0
    %331 = vmatpush2.bf16.msra.mxu0 0
    %332 = vmatprep.subr.bf16.mxu0 0
    %333 = vmatpush2.bf16.msra.mxu0 0
    %334 = vmatprep.subr.bf16.mxu0 0
    %335 = vmatpush2.bf16.msra.mxu0 0
    %336 = vmatprep.subr.bf16.mxu0 0
    %337 = vmatpush2.bf16.msra.mxu0 0
    %338 = vmatprep.subr.bf16.mxu0 0
    %339 = vmatpush2.bf16.msra.mxu0 0
    %340 = vmatprep.subr.bf16.mxu0 0
    %341 = vmatpush2.bf16.msra.mxu0 0
    %342 = vmatprep.subr.bf16.mxu0 0
    %343 = vmatpush2.bf16.msra.mxu0 0
    %344 = vmatprep.subr.bf16.mxu0 0
    %345 = vmatpush2.bf16.msra.mxu0 0
    %346 = vmatprep.mubr.bf16.mxu0 0
    %347 = vmatmul.mubr.bf16.gmra.mxu0 %v312
    %v348 = vpop.f32.mrf.mxu0
    %v349 = vadd.f32 %v300, %v348
    %v350 = vpop.f32.mrf.mxu0
    %v351 = vpop.f32.mrf.mxu0
    %v352 = vpop.f32.mrf.mxu0
    %353 = vdwg.mxu0
    %v354 = vadd.f32 %v349, %v201
    %v355 = vxor.u32 %v354, 2147483648
    %v356 = vmul.f32 %v355, 1.442695
    %v357 = vpow.pop %v356
    %v358 = vadd.f32 %v357, 1.0
    %v359 = vrcp.pop %v358
    %v360 = vmul.f32 1.0, %v359
    %v361 = vtanh.pop %v354
    %v362 = vmul.f32 %v360, %v224
    %364 = vrot.lane.b32.xlu0 %v361, 64
    %v365 = vpop.permute.xlu0 %364
    %v367 = vmul.f32 %v360, %v365
    %369 = vrot.lane.b32.xlu0 %v367, 32
    %v370 = vpop.permute.xlu0 %369
    %v372 = vadd.f32 %v362, %v370
    %v373 = vtanh.pop %v372
    %375 = vrot.lane.b32.xlu0 %v373, 64
    %v376 = vpop.permute.xlu0 %375
    %v378 = vmul.f32 %v360, %v376
    %v379 = vpack.c.bf16 %v378, %v378
    %v381 = vunpack.c.l.b16 %v379
    %v382 = vpack.c.b16 %v381, %v381
    %383 = vrot.lane.b32.xlu0 %v382, 32
    %v384 = vpop.permute.xlu0 %383
    %s386 = scalar_lea.vmem [#allocation10], 4
    %387 = vst.msk [vmem:[%s386] sm:$0xf] %vm238, %v384
    %s388 = scalar_lea.vmem [#allocation4], 8
    %v389 = vld [vmem:[%s388] sm:$0xf]
    %v390 = vld [vmem:[#allocation7] sm:$0xf]
    %v391 = vld [vmem:[#allocation7 + $0x4] sm:$0xf]
    %v392 = vld [vmem:[#allocation9] sm:$0xf]
    %v393 = vld [vmem:[#allocation9 + $0x4] sm:$0xf]
    %v394 = vld [vmem:[#allocation9 + $0x8] sm:$0xf]
    %v395 = vld [vmem:[#allocation9 + $0xc] sm:$0xf]
    %396 = vrot.lane.b32.xlu0 %v379, 32
    %v397 = vpop.permute.xlu0 %396
    %v402 = vunpack.c.l.b16 %v392
    %v403 = vunpack.c.l.b16 %v393
    %v404 = vunpack.c.l.b16 %v394
    %v405 = vunpack.c.l.b16 %v395
    %v406 = vpack.c.b16 %v403, %v402
    %v407 = vpack.c.b16 %v405, %v404
    %v411 = vsel %vm104, %v397, 0
    %413 = vmatprep.subr.bf16.mxu0 0
    %414 = vmatpush1.bf16.msra.mxu0 0
    %415 = vmatprep.subr.bf16.mxu0 0
    %416 = vmatpush1.bf16.msra.mxu0 0
    %417 = vmatprep.subr.bf16.mxu0 0
    %418 = vmatpush1.bf16.msra.mxu0 0
    %419 = vmatprep.subr.bf16.mxu0 0
    %420 = vmatpush1.bf16.msra.mxu0 0
    %421 = vmatprep.subr.bf16.mxu0 0
    %422 = vmatpush1.bf16.msra.mxu0 0
    %423 = vmatprep.subr.bf16.mxu0 0
    %424 = vmatpush1.bf16.msra.mxu0 0
    %425 = vmatprep.subr.bf16.mxu0 0
    %426 = vmatpush1.bf16.msra.mxu0 %v407
    %427 = vmatprep.subr.bf16.mxu0 0
    %428 = vmatpush1.bf16.msra.mxu0 %v406
    %429 = vmatprep.subr.bf16.mxu0 0
    %430 = vmatpush2.bf16.msra.mxu0 0
    %431 = vmatprep.subr.bf16.mxu0 0
    %432 = vmatpush2.bf16.msra.mxu0 0
    %433 = vmatprep.subr.bf16.mxu0 0
    %434 = vmatpush2.bf16.msra.mxu0 0
    %435 = vmatprep.subr.bf16.mxu0 0
    %436 = vmatpush2.bf16.msra.mxu0 0
    %437 = vmatprep.subr.bf16.mxu0 0
    %438 = vmatpush2.bf16.msra.mxu0 0
    %439 = vmatprep.subr.bf16.mxu0 0
    %440 = vmatpush2.bf16.msra.mxu0 0
    %441 = vmatprep.subr.bf16.mxu0 0
    %442 = vmatpush2.bf16.msra.mxu0 0
    %443 = vmatprep.subr.bf16.mxu0 0
    %444 = vmatpush2.bf16.msra.mxu0 0
    %445 = vmatprep.mubr.bf16.mxu0 0
    %446 = vmatmul.mubr.bf16.gmra.mxu0 %v411
    %v447 = vpop.f32.mrf.mxu0
    %v448 = vadd.f32 0.0, %v447
    %v449 = vpop.f32.mrf.mxu0
    %v450 = vpop.f32.mrf.mxu0
    %v451 = vpop.f32.mrf.mxu0
    %452 = vdwg.mxu0
    %v455 = vunpack.c.l.b16 %v390
    %v456 = vunpack.c.l.b16 %v391
    %v457 = vpack.c.b16 %v456, %v455
    %v460 = vsel %vm154, %v389, 0
    %462 = vmatprep.subr.bf16.mxu0 0
    %463 = vmatpush1.bf16.msra.mxu0 0
    %464 = vmatprep.subr.bf16.mxu0 0
    %465 = vmatpush1.bf16.msra.mxu0 0
    %466 = vmatprep.subr.bf16.mxu0 0
    %467 = vmatpush1.bf16.msra.mxu0 0
    %468 = vmatprep.subr.bf16.mxu0 0
    %469 = vmatpush1.bf16.msra.mxu0 0
    %470 = vmatprep.subr.bf16.mxu0 0
    %471 = vmatpush1.bf16.msra.mxu0 0
    %472 = vmatprep.subr.bf16.mxu0 0
    %473 = vmatpush1.bf16.msra.mxu0 0
    %474 = vmatprep.subr.bf16.mxu0 0
    %475 = vmatpush1.bf16.msra.mxu0 0
    %476 = vmatprep.subr.bf16.mxu0 0
    %477 = vmatpush1.bf16.msra.mxu0 %v457
    %478 = vmatprep.subr.bf16.mxu0 0
    %479 = vmatpush2.bf16.msra.mxu0 0
    %480 = vmatprep.subr.bf16.mxu0 0
    %481 = vmatpush2.bf16.msra.mxu0 0
    %482 = vmatprep.subr.bf16.mxu0 0
    %483 = vmatpush2.bf16.msra.mxu0 0
    %484 = vmatprep.subr.bf16.mxu0 0
    %485 = vmatpush2.bf16.msra.mxu0 0
    %486 = vmatprep.subr.bf16.mxu0 0
    %487 = vmatpush2.bf16.msra.mxu0 0
    %488 = vmatprep.subr.bf16.mxu0 0
    %489 = vmatpush2.bf16.msra.mxu0 0
    %490 = vmatprep.subr.bf16.mxu0 0
    %491 = vmatpush2.bf16.msra.mxu0 0
    %492 = vmatprep.subr.bf16.mxu0 0
    %493 = vmatpush2.bf16.msra.mxu0 0
    %494 = vmatprep.mubr.bf16.mxu0 0
    %495 = vmatmul.mubr.bf16.gmra.mxu0 %v460
    %v496 = vpop.f32.mrf.mxu0
    %v497 = vadd.f32 %v448, %v496
    %v498 = vpop.f32.mrf.mxu0
    %v499 = vpop.f32.mrf.mxu0
    %v500 = vpop.f32.mrf.mxu0
    %501 = vdwg.mxu0
    %v502 = vadd.f32 %v497, %v201
    %v503 = vxor.u32 %v502, 2147483648
    %v504 = vmul.f32 %v503, 1.442695
    %v505 = vpow.pop %v504
    %v506 = vadd.f32 %v505, 1.0
    %v507 = vrcp.pop %v506
    %v508 = vmul.f32 1.0, %v507
    %v509 = vtanh.pop %v502
    %v510 = vmul.f32 %v508, %v372
    %512 = vrot.lane.b32.xlu0 %v509, 64
    %v513 = vpop.permute.xlu0 %512
    %v515 = vmul.f32 %v508, %v513
    %517 = vrot.lane.b32.xlu0 %v515, 32
    %v518 = vpop.permute.xlu0 %517
    %v520 = vadd.f32 %v510, %v518
    %v521 = vtanh.pop %v520
    %523 = vrot.lane.b32.xlu0 %v521, 64
    %v524 = vpop.permute.xlu0 %523
    %v526 = vmul.f32 %v508, %v524
    %v527 = vpack.c.bf16 %v526, %v526
    %v529 = vunpack.c.l.b16 %v527
    %v530 = vpack.c.b16 %v529, %v529
    %531 = vrot.lane.b32.xlu0 %v530, 32
    %v532 = vpop.permute.xlu0 %531
    %s534 = scalar_lea.vmem [#allocation10], 8
    %535 = vst.msk [vmem:[%s534] sm:$0xf] %vm238, %v532
    %s536 = scalar_lea.vmem [#allocation4], 12
    %v537 = vld [vmem:[%s536] sm:$0xf]
    %v538 = vld [vmem:[#allocation7] sm:$0xf]
    %v539 = vld [vmem:[#allocation7 + $0x4] sm:$0xf]
    %v540 = vld [vmem:[#allocation9] sm:$0xf]
    %v541 = vld [vmem:[#allocation9 + $0x4] sm:$0xf]
    %v542 = vld [vmem:[#allocation9 + $0x8] sm:$0xf]
    %v543 = vld [vmem:[#allocation9 + $0xc] sm:$0xf]
    %544 = vrot.lane.b32.xlu0 %v527, 32
    %v545 = vpop.permute.xlu0 %544
    %v550 = vunpack.c.l.b16 %v540
    %v551 = vunpack.c.l.b16 %v541
    %v552 = vunpack.c.l.b16 %v542
    %v553 = vunpack.c.l.b16 %v543
    %v554 = vpack.c.b16 %v551, %v550
    %v555 = vpack.c.b16 %v553, %v552
    %v559 = vsel %vm104, %v545, 0
    %561 = vmatprep.subr.bf16.mxu0 0
    %562 = vmatpush1.bf16.msra.mxu0 0
    %563 = vmatprep.subr.bf16.mxu0 0
    %564 = vmatpush1.bf16.msra.mxu0 0
    %565 = vmatprep.subr.bf16.mxu0 0
    %566 = vmatpush1.bf16.msra.mxu0 0
    %567 = vmatprep.subr.bf16.mxu0 0
    %568 = vmatpush1.bf16.msra.mxu0 0
    %569 = vmatprep.subr.bf16.mxu0 0
    %570 = vmatpush1.bf16.msra.mxu0 0
    %571 = vmatprep.subr.bf16.mxu0 0
    %572 = vmatpush1.bf16.msra.mxu0 0
    %573 = vmatprep.subr.bf16.mxu0 0
    %574 = vmatpush1.bf16.msra.mxu0 %v555
    %575 = vmatprep.subr.bf16.mxu0 0
    %576 = vmatpush1.bf16.msra.mxu0 %v554
    %577 = vmatprep.subr.bf16.mxu0 0
    %578 = vmatpush2.bf16.msra.mxu0 0
    %579 = vmatprep.subr.bf16.mxu0 0
    %580 = vmatpush2.bf16.msra.mxu0 0
    %581 = vmatprep.subr.bf16.mxu0 0
    %582 = vmatpush2.bf16.msra.mxu0 0
    %583 = vmatprep.subr.bf16.mxu0 0
    %584 = vmatpush2.bf16.msra.mxu0 0
    %585 = vmatprep.subr.bf16.mxu0 0
    %586 = vmatpush2.bf16.msra.mxu0 0
    %587 = vmatprep.subr.bf16.mxu0 0
    %588 = vmatpush2.bf16.msra.mxu0 0
    %589 = vmatprep.subr.bf16.mxu0 0
    %590 = vmatpush2.bf16.msra.mxu0 0
    %591 = vmatprep.subr.bf16.mxu0 0
    %592 = vmatpush2.bf16.msra.mxu0 0
    %593 = vmatprep.mubr.bf16.mxu0 0
    %594 = vmatmul.mubr.bf16.gmra.mxu0 %v559
    %v595 = vpop.f32.mrf.mxu0
    %v596 = vadd.f32 0.0, %v595
    %v597 = vpop.f32.mrf.mxu0
    %v598 = vpop.f32.mrf.mxu0
    %v599 = vpop.f32.mrf.mxu0
    %600 = vdwg.mxu0
    %v603 = vunpack.c.l.b16 %v538
    %v604 = vunpack.c.l.b16 %v539
    %v605 = vpack.c.b16 %v604, %v603
    %v608 = vsel %vm154, %v537, 0
    %610 = vmatprep.subr.bf16.mxu0 0
    %611 = vmatpush1.bf16.msra.mxu0 0
    %612 = vmatprep.subr.bf16.mxu0 0
    %613 = vmatpush1.bf16.msra.mxu0 0
    %614 = vmatprep.subr.bf16.mxu0 0
    %615 = vmatpush1.bf16.msra.mxu0 0
    %616 = vmatprep.subr.bf16.mxu0 0
    %617 = vmatpush1.bf16.msra.mxu0 0
    %618 = vmatprep.subr.bf16.mxu0 0
    %619 = vmatpush1.bf16.msra.mxu0 0
    %620 = vmatprep.subr.bf16.mxu0 0
    %621 = vmatpush1.bf16.msra.mxu0 0
    %622 = vmatprep.subr.bf16.mxu0 0
    %623 = vmatpush1.bf16.msra.mxu0 0
    %624 = vmatprep.subr.bf16.mxu0 0
    %625 = vmatpush1.bf16.msra.mxu0 %v605
    %626 = vmatprep.subr.bf16.mxu0 0
    %627 = vmatpush2.bf16.msra.mxu0 0
    %628 = vmatprep.subr.bf16.mxu0 0
    %629 = vmatpush2.bf16.msra.mxu0 0
    %630 = vmatprep.subr.bf16.mxu0 0
    %631 = vmatpush2.bf16.msra.mxu0 0
    %632 = vmatprep.subr.bf16.mxu0 0
    %633 = vmatpush2.bf16.msra.mxu0 0
    %634 = vmatprep.subr.bf16.mxu0 0
    %635 = vmatpush2.bf16.msra.mxu0 0
    %636 = vmatprep.subr.bf16.mxu0 0
    %637 = vmatpush2.bf16.msra.mxu0 0
    %638 = vmatprep.subr.bf16.mxu0 0
    %639 = vmatpush2.bf16.msra.mxu0 0
    %640 = vmatprep.subr.bf16.mxu0 0
    %641 = vmatpush2.bf16.msra.mxu0 0
    %642 = vmatprep.mubr.bf16.mxu0 0
    %643 = vmatmul.mubr.bf16.gmra.mxu0 %v608
    %v644 = vpop.f32.mrf.mxu0
    %v645 = vadd.f32 %v596, %v644
    %v646 = vpop.f32.mrf.mxu0
    %v647 = vpop.f32.mrf.mxu0
    %v648 = vpop.f32.mrf.mxu0
    %649 = vdwg.mxu0
    %v650 = vadd.f32 %v645, %v201
    %v651 = vxor.u32 %v650, 2147483648
    %v652 = vmul.f32 %v651, 1.442695
    %v653 = vpow.pop %v652
    %v654 = vadd.f32 %v653, 1.0
    %v655 = vrcp.pop %v654
    %v656 = vmul.f32 1.0, %v655
    %v657 = vtanh.pop %v650
    %v658 = vmul.f32 %v656, %v520
    %660 = vrot.lane.b32.xlu0 %v657, 64
    %v661 = vpop.permute.xlu0 %660
    %v663 = vmul.f32 %v656, %v661
    %665 = vrot.lane.b32.xlu0 %v663, 32
    %v666 = vpop.permute.xlu0 %665
    %v668 = vadd.f32 %v658, %v666
    %v669 = vtanh.pop %v668
    %671 = vrot.lane.b32.xlu0 %v669, 64
    %v672 = vpop.permute.xlu0 %671
    %v674 = vmul.f32 %v656, %v672
    %v675 = vpack.c.bf16 %v674, %v674
    %v677 = vunpack.c.l.b16 %v675
    %v678 = vpack.c.b16 %v677, %v677
    %679 = vrot.lane.b32.xlu0 %v678, 32
    %v680 = vpop.permute.xlu0 %679
    %s682 = scalar_lea.vmem [#allocation10], 12
    %683 = vst.msk [vmem:[%s682] sm:$0xf] %vm238, %v680
    %s684 = scalar_lea.vmem [#allocation4], 16
    %v685 = vld [vmem:[%s684] sm:$0xf]
    %v686 = vld [vmem:[#allocation7] sm:$0xf]
    %v687 = vld [vmem:[#allocation7 + $0x4] sm:$0xf]
    %v688 = vld [vmem:[#allocation9] sm:$0xf]
    %v689 = vld [vmem:[#allocation9 + $0x4] sm:$0xf]
    %v690 = vld [vmem:[#allocation9 + $0x8] sm:$0xf]
    %v691 = vld [vmem:[#allocation9 + $0xc] sm:$0xf]
    %692 = vrot.lane.b32.xlu0 %v675, 32
    %v693 = vpop.permute.xlu0 %692
    %v698 = vunpack.c.l.b16 %v688
    %v699 = vunpack.c.l.b16 %v689
    %v700 = vunpack.c.l.b16 %v690
    %v701 = vunpack.c.l.b16 %v691
    %v702 = vpack.c.b16 %v699, %v698
    %v703 = vpack.c.b16 %v701, %v700
    %v707 = vsel %vm104, %v693, 0
    %709 = vmatprep.subr.bf16.mxu0 0
    %710 = vmatpush1.bf16.msra.mxu0 0
    %711 = vmatprep.subr.bf16.mxu0 0
    %712 = vmatpush1.bf16.msra.mxu0 0
    %713 = vmatprep.subr.bf16.mxu0 0
    %714 = vmatpush1.bf16.msra.mxu0 0
    %715 = vmatprep.subr.bf16.mxu0 0
    %716 = vmatpush1.bf16.msra.mxu0 0
    %717 = vmatprep.subr.bf16.mxu0 0
    %718 = vmatpush1.bf16.msra.mxu0 0
    %719 = vmatprep.subr.bf16.mxu0 0
    %720 = vmatpush1.bf16.msra.mxu0 0
    %721 = vmatprep.subr.bf16.mxu0 0
    %722 = vmatpush1.bf16.msra.mxu0 %v703
    %723 = vmatprep.subr.bf16.mxu0 0
    %724 = vmatpush1.bf16.msra.mxu0 %v702
    %725 = vmatprep.subr.bf16.mxu0 0
    %726 = vmatpush2.bf16.msra.mxu0 0
    %727 = vmatprep.subr.bf16.mxu0 0
    %728 = vmatpush2.bf16.msra.mxu0 0
    %729 = vmatprep.subr.bf16.mxu0 0
    %730 = vmatpush2.bf16.msra.mxu0 0
    %731 = vmatprep.subr.bf16.mxu0 0
    %732 = vmatpush2.bf16.msra.mxu0 0
    %733 = vmatprep.subr.bf16.mxu0 0
    %734 = vmatpush2.bf16.msra.mxu0 0
    %735 = vmatprep.subr.bf16.mxu0 0
    %736 = vmatpush2.bf16.msra.mxu0 0
    %737 = vmatprep.subr.bf16.mxu0 0
    %738 = vmatpush2.bf16.msra.mxu0 0
    %739 = vmatprep.subr.bf16.mxu0 0
    %740 = vmatpush2.bf16.msra.mxu0 0
    %741 = vmatprep.mubr.bf16.mxu0 0
    %742 = vmatmul.mubr.bf16.gmra.mxu0 %v707
    %v743 = vpop.f32.mrf.mxu0
    %v744 = vadd.f32 0.0, %v743
    %v745 = vpop.f32.mrf.mxu0
    %v746 = vpop.f32.mrf.mxu0
    %v747 = vpop.f32.mrf.mxu0
    %748 = vdwg.mxu0
    %v751 = vunpack.c.l.b16 %v686
    %v752 = vunpack.c.l.b16 %v687
    %v753 = vpack.c.b16 %v752, %v751
    %v756 = vsel %vm154, %v685, 0
    %758 = vmatprep.subr.bf16.mxu0 0
    %759 = vmatpush1.bf16.msra.mxu0 0
    %760 = vmatprep.subr.bf16.mxu0 0
    %761 = vmatpush1.bf16.msra.mxu0 0
    %762 = vmatprep.subr.bf16.mxu0 0
    %763 = vmatpush1.bf16.msra.mxu0 0
    %764 = vmatprep.subr.bf16.mxu0 0
    %765 = vmatpush1.bf16.msra.mxu0 0
    %766 = vmatprep.subr.bf16.mxu0 0
    %767 = vmatpush1.bf16.msra.mxu0 0
    %768 = vmatprep.subr.bf16.mxu0 0
    %769 = vmatpush1.bf16.msra.mxu0 0
    %770 = vmatprep.subr.bf16.mxu0 0
    %771 = vmatpush1.bf16.msra.mxu0 0
    %772 = vmatprep.subr.bf16.mxu0 0
    %773 = vmatpush1.bf16.msra.mxu0 %v753
    %774 = vmatprep.subr.bf16.mxu0 0
    %775 = vmatpush2.bf16.msra.mxu0 0
    %776 = vmatprep.subr.bf16.mxu0 0
    %777 = vmatpush2.bf16.msra.mxu0 0
    %778 = vmatprep.subr.bf16.mxu0 0
    %779 = vmatpush2.bf16.msra.mxu0 0
    %780 = vmatprep.subr.bf16.mxu0 0
    %781 = vmatpush2.bf16.msra.mxu0 0
    %782 = vmatprep.subr.bf16.mxu0 0
    %783 = vmatpush2.bf16.msra.mxu0 0
    %784 = vmatprep.subr.bf16.mxu0 0
    %785 = vmatpush2.bf16.msra.mxu0 0
    %786 = vmatprep.subr.bf16.mxu0 0
    %787 = vmatpush2.bf16.msra.mxu0 0
    %788 = vmatprep.subr.bf16.mxu0 0
    %789 = vmatpush2.bf16.msra.mxu0 0
    %790 = vmatprep.mubr.bf16.mxu0 0
    %791 = vmatmul.mubr.bf16.gmra.mxu0 %v756
    %v792 = vpop.f32.mrf.mxu0
    %v793 = vadd.f32 %v744, %v792
    %v794 = vpop.f32.mrf.mxu0
    %v795 = vpop.f32.mrf.mxu0
    %v796 = vpop.f32.mrf.mxu0
    %797 = vdwg.mxu0
    %v798 = vadd.f32 %v793, %v201
    %v799 = vxor.u32 %v798, 2147483648
    %v800 = vmul.f32 %v799, 1.442695
    %v801 = vpow.pop %v800
    %v802 = vadd.f32 %v801, 1.0
    %v803 = vrcp.pop %v802
    %v804 = vmul.f32 1.0, %v803
    %v805 = vtanh.pop %v798
    %v806 = vmul.f32 %v804, %v668
    %808 = vrot.lane.b32.xlu0 %v805, 64
    %v809 = vpop.permute.xlu0 %808
    %v811 = vmul.f32 %v804, %v809
    %813 = vrot.lane.b32.xlu0 %v811, 32
    %v814 = vpop.permute.xlu0 %813
    %v816 = vadd.f32 %v806, %v814
    %v817 = vtanh.pop %v816
    %819 = vrot.lane.b32.xlu0 %v817, 64
    %v820 = vpop.permute.xlu0 %819
    %v822 = vmul.f32 %v804, %v820
    %v823 = vpack.c.bf16 %v822, %v822
    %v825 = vunpack.c.l.b16 %v823
    %v826 = vpack.c.b16 %v825, %v825
    %827 = vrot.lane.b32.xlu0 %v826, 32
    %v828 = vpop.permute.xlu0 %827
    %s830 = scalar_lea.vmem [#allocation10], 16
    %831 = vst.msk [vmem:[%s830] sm:$0xf] %vm238, %v828
    %s832 = scalar_lea.vmem [#allocation4], 20
    %v833 = vld [vmem:[%s832] sm:$0xf]
    %v834 = vld [vmem:[#allocation7] sm:$0xf]
    %v835 = vld [vmem:[#allocation7 + $0x4] sm:$0xf]
    %v836 = vld [vmem:[#allocation9] sm:$0xf]
    %v837 = vld [vmem:[#allocation9 + $0x4] sm:$0xf]
    %v838 = vld [vmem:[#allocation9 + $0x8] sm:$0xf]
    %v839 = vld [vmem:[#allocation9 + $0xc] sm:$0xf]
    %840 = vrot.lane.b32.xlu0 %v823, 32
    %v841 = vpop.permute.xlu0 %840
    %v846 = vunpack.c.l.b16 %v836
    %v847 = vunpack.c.l.b16 %v837
    %v848 = vunpack.c.l.b16 %v838
    %v849 = vunpack.c.l.b16 %v839
    %v850 = vpack.c.b16 %v847, %v846
    %v851 = vpack.c.b16 %v849, %v848
    %v855 = vsel %vm104, %v841, 0
    %857 = vmatprep.subr.bf16.mxu0 0
    %858 = vmatpush1.bf16.msra.mxu0 0
    %859 = vmatprep.subr.bf16.mxu0 0
    %860 = vmatpush1.bf16.msra.mxu0 0
    %861 = vmatprep.subr.bf16.mxu0 0
    %862 = vmatpush1.bf16.msra.mxu0 0
    %863 = vmatprep.subr.bf16.mxu0 0
    %864 = vmatpush1.bf16.msra.mxu0 0
    %865 = vmatprep.subr.bf16.mxu0 0
    %866 = vmatpush1.bf16.msra.mxu0 0
    %867 = vmatprep.subr.bf16.mxu0 0
    %868 = vmatpush1.bf16.msra.mxu0 0
    %869 = vmatprep.subr.bf16.mxu0 0
    %870 = vmatpush1.bf16.msra.mxu0 %v851
    %871 = vmatprep.subr.bf16.mxu0 0
    %872 = vmatpush1.bf16.msra.mxu0 %v850
    %873 = vmatprep.subr.bf16.mxu0 0
    %874 = vmatpush2.bf16.msra.mxu0 0
    %875 = vmatprep.subr.bf16.mxu0 0
    %876 = vmatpush2.bf16.msra.mxu0 0
    %877 = vmatprep.subr.bf16.mxu0 0
    %878 = vmatpush2.bf16.msra.mxu0 0
    %879 = vmatprep.subr.bf16.mxu0 0
    %880 = vmatpush2.bf16.msra.mxu0 0
    %881 = vmatprep.subr.bf16.mxu0 0
    %882 = vmatpush2.bf16.msra.mxu0 0
    %883 = vmatprep.subr.bf16.mxu0 0
    %884 = vmatpush2.bf16.msra.mxu0 0
    %885 = vmatprep.subr.bf16.mxu0 0
    %886 = vmatpush2.bf16.msra.mxu0 0
    %887 = vmatprep.subr.bf16.mxu0 0
    %888 = vmatpush2.bf16.msra.mxu0 0
    %889 = vmatprep.mubr.bf16.mxu0 0
    %890 = vmatmul.mubr.bf16.gmra.mxu0 %v855
    %v891 = vpop.f32.mrf.mxu0
    %v892 = vadd.f32 0.0, %v891
    %v893 = vpop.f32.mrf.mxu0
    %v894 = vpop.f32.mrf.mxu0
    %v895 = vpop.f32.mrf.mxu0
    %896 = vdwg.mxu0
    %v899 = vunpack.c.l.b16 %v834
    %v900 = vunpack.c.l.b16 %v835
    %v901 = vpack.c.b16 %v900, %v899
    %v904 = vsel %vm154, %v833, 0
    %906 = vmatprep.subr.bf16.mxu0 0
    %907 = vmatpush1.bf16.msra.mxu0 0
    %908 = vmatprep.subr.bf16.mxu0 0
    %909 = vmatpush1.bf16.msra.mxu0 0
    %910 = vmatprep.subr.bf16.mxu0 0
    %911 = vmatpush1.bf16.msra.mxu0 0
    %912 = vmatprep.subr.bf16.mxu0 0
    %913 = vmatpush1.bf16.msra.mxu0 0
    %914 = vmatprep.subr.bf16.mxu0 0
    %915 = vmatpush1.bf16.msra.mxu0 0
    %916 = vmatprep.subr.bf16.mxu0 0
    %917 = vmatpush1.bf16.msra.mxu0 0
    %918 = vmatprep.subr.bf16.mxu0 0
    %919 = vmatpush1.bf16.msra.mxu0 0
    %920 = vmatprep.subr.bf16.mxu0 0
    %921 = vmatpush1.bf16.msra.mxu0 %v901
    %922 = vmatprep.subr.bf16.mxu0 0
    %923 = vmatpush2.bf16.msra.mxu0 0
    %924 = vmatprep.subr.bf16.mxu0 0
    %925 = vmatpush2.bf16.msra.mxu0 0
    %926 = vmatprep.subr.bf16.mxu0 0
    %927 = vmatpush2.bf16.msra.mxu0 0
    %928 = vmatprep.subr.bf16.mxu0 0
    %929 = vmatpush2.bf16.msra.mxu0 0
    %930 = vmatprep.subr.bf16.mxu0 0
    %931 = vmatpush2.bf16.msra.mxu0 0
    %932 = vmatprep.subr.bf16.mxu0 0
    %933 = vmatpush2.bf16.msra.mxu0 0
    %934 = vmatprep.subr.bf16.mxu0 0
    %935 = vmatpush2.bf16.msra.mxu0 0
    %936 = vmatprep.subr.bf16.mxu0 0
    %937 = vmatpush2.bf16.msra.mxu0 0
    %938 = vmatprep.mubr.bf16.mxu0 0
    %939 = vmatmul.mubr.bf16.gmra.mxu0 %v904
    %v940 = vpop.f32.mrf.mxu0
    %v941 = vadd.f32 %v892, %v940
    %v942 = vpop.f32.mrf.mxu0
    %v943 = vpop.f32.mrf.mxu0
    %v944 = vpop.f32.mrf.mxu0
    %945 = vdwg.mxu0
    %v946 = vadd.f32 %v941, %v201
    %v947 = vxor.u32 %v946, 2147483648
    %v948 = vmul.f32 %v947, 1.442695
    %v949 = vpow.pop %v948
    %v950 = vadd.f32 %v949, 1.0
    %v951 = vrcp.pop %v950
    %v952 = vmul.f32 1.0, %v951
    %v953 = vtanh.pop %v946
    %v954 = vmul.f32 %v952, %v816
    %956 = vrot.lane.b32.xlu0 %v953, 64
    %v957 = vpop.permute.xlu0 %956
    %v959 = vmul.f32 %v952, %v957
    %961 = vrot.lane.b32.xlu0 %v959, 32
    %v962 = vpop.permute.xlu0 %961
    %v964 = vadd.f32 %v954, %v962
    %v965 = vtanh.pop %v964
    %967 = vrot.lane.b32.xlu0 %v965, 64
    %v968 = vpop.permute.xlu0 %967
    %v970 = vmul.f32 %v952, %v968
    %v971 = vpack.c.bf16 %v970, %v970
    %v973 = vunpack.c.l.b16 %v971
    %v974 = vpack.c.b16 %v973, %v973
    %975 = vrot.lane.b32.xlu0 %v974, 32
    %v976 = vpop.permute.xlu0 %975
    %s978 = scalar_lea.vmem [#allocation10], 20
    %979 = vst.msk [vmem:[%s978] sm:$0xf] %vm238, %v976
    %s980 = scalar_lea.vmem [#allocation4], 24
    %v981 = vld [vmem:[%s980] sm:$0xf]
    %v982 = vld [vmem:[#allocation7] sm:$0xf]
    %v983 = vld [vmem:[#allocation7 + $0x4] sm:$0xf]
    %v984 = vld [vmem:[#allocation9] sm:$0xf]
    %v985 = vld [vmem:[#allocation9 + $0x4] sm:$0xf]
    %v986 = vld [vmem:[#allocation9 + $0x8] sm:$0xf]
    %v987 = vld [vmem:[#allocation9 + $0xc] sm:$0xf]
    %988 = vrot.lane.b32.xlu0 %v971, 32
    %v989 = vpop.permute.xlu0 %988
    %v994 = vunpack.c.l.b16 %v984
    %v995 = vunpack.c.l.b16 %v985
    %v996 = vunpack.c.l.b16 %v986
    %v997 = vunpack.c.l.b16 %v987
    %v998 = vpack.c.b16 %v995, %v994
    %v999 = vpack.c.b16 %v997, %v996
    %v1003 = vsel %vm104, %v989, 0
    %1005 = vmatprep.subr.bf16.mxu0 0
    %1006 = vmatpush1.bf16.msra.mxu0 0
    %1007 = vmatprep.subr.bf16.mxu0 0
    %1008 = vmatpush1.bf16.msra.mxu0 0
    %1009 = vmatprep.subr.bf16.mxu0 0
    %1010 = vmatpush1.bf16.msra.mxu0 0
    %1011 = vmatprep.subr.bf16.mxu0 0
    %1012 = vmatpush1.bf16.msra.mxu0 0
    %1013 = vmatprep.subr.bf16.mxu0 0
    %1014 = vmatpush1.bf16.msra.mxu0 0
    %1015 = vmatprep.subr.bf16.mxu0 0
    %1016 = vmatpush1.bf16.msra.mxu0 0
    %1017 = vmatprep.subr.bf16.mxu0 0
    %1018 = vmatpush1.bf16.msra.mxu0 %v999
    %1019 = vmatprep.subr.bf16.mxu0 0
    %1020 = vmatpush1.bf16.msra.mxu0 %v998
    %1021 = vmatprep.subr.bf16.mxu0 0
    %1022 = vmatpush2.bf16.msra.mxu0 0
    %1023 = vmatprep.subr.bf16.mxu0 0
    %1024 = vmatpush2.bf16.msra.mxu0 0
    %1025 = vmatprep.subr.bf16.mxu0 0
    %1026 = vmatpush2.bf16.msra.mxu0 0
    %1027 = vmatprep.subr.bf16.mxu0 0
    %1028 = vmatpush2.bf16.msra.mxu0 0
    %1029 = vmatprep.subr.bf16.mxu0 0
    %1030 = vmatpush2.bf16.msra.mxu0 0
    %1031 = vmatprep.subr.bf16.mxu0 0
    %1032 = vmatpush2.bf16.msra.mxu0 0
    %1033 = vmatprep.subr.bf16.mxu0 0
    %1034 = vmatpush2.bf16.msra.mxu0 0
    %1035 = vmatprep.subr.bf16.mxu0 0
    %1036 = vmatpush2.bf16.msra.mxu0 0
    %1037 = vmatprep.mubr.bf16.mxu0 0
    %1038 = vmatmul.mubr.bf16.gmra.mxu0 %v1003
    %v1039 = vpop.f32.mrf.mxu0
    %v1040 = vadd.f32 0.0, %v1039
    %v1041 = vpop.f32.mrf.mxu0
    %v1042 = vpop.f32.mrf.mxu0
    %v1043 = vpop.f32.mrf.mxu0
    %1044 = vdwg.mxu0
    %v1047 = vunpack.c.l.b16 %v982
    %v1048 = vunpack.c.l.b16 %v983
    %v1049 = vpack.c.b16 %v1048, %v1047
    %v1052 = vsel %vm154, %v981, 0
    %1054 = vmatprep.subr.bf16.mxu0 0
    %1055 = vmatpush1.bf16.msra.mxu0 0
    %1056 = vmatprep.subr.bf16.mxu0 0
    %1057 = vmatpush1.bf16.msra.mxu0 0
    %1058 = vmatprep.subr.bf16.mxu0 0
    %1059 = vmatpush1.bf16.msra.mxu0 0
    %1060 = vmatprep.subr.bf16.mxu0 0
    %1061 = vmatpush1.bf16.msra.mxu0 0
    %1062 = vmatprep.subr.bf16.mxu0 0
    %1063 = vmatpush1.bf16.msra.mxu0 0
    %1064 = vmatprep.subr.bf16.mxu0 0
    %1065 = vmatpush1.bf16.msra.mxu0 0
    %1066 = vmatprep.subr.bf16.mxu0 0
    %1067 = vmatpush1.bf16.msra.mxu0 0
    %1068 = vmatprep.subr.bf16.mxu0 0
    %1069 = vmatpush1.bf16.msra.mxu0 %v1049
    %1070 = vmatprep.subr.bf16.mxu0 0
    %1071 = vmatpush2.bf16.msra.mxu0 0
    %1072 = vmatprep.subr.bf16.mxu0 0
    %1073 = vmatpush2.bf16.msra.mxu0 0
    %1074 = vmatprep.subr.bf16.mxu0 0
    %1075 = vmatpush2.bf16.msra.mxu0 0
    %1076 = vmatprep.subr.bf16.mxu0 0
    %1077 = vmatpush2.bf16.msra.mxu0 0
    %1078 = vmatprep.subr.bf16.mxu0 0
    %1079 = vmatpush2.bf16.msra.mxu0 0
    %1080 = vmatprep.subr.bf16.mxu0 0
    %1081 = vmatpush2.bf16.msra.mxu0 0
    %1082 = vmatprep.subr.bf16.mxu0 0
    %1083 = vmatpush2.bf16.msra.mxu0 0
    %1084 = vmatprep.subr.bf16.mxu0 0
    %1085 = vmatpush2.bf16.msra.mxu0 0
    %1086 = vmatprep.mubr.bf16.mxu0 0
    %1087 = vmatmul.mubr.bf16.gmra.mxu0 %v1052
    %v1088 = vpop.f32.mrf.mxu0
    %v1089 = vadd.f32 %v1040, %v1088
    %v1090 = vpop.f32.mrf.mxu0
    %v1091 = vpop.f32.mrf.mxu0
    %v1092 = vpop.f32.mrf.mxu0
    %1093 = vdwg.mxu0
    %v1094 = vadd.f32 %v1089, %v201
    %v1095 = vxor.u32 %v1094, 2147483648
    %v1096 = vmul.f32 %v1095, 1.442695
    %v1097 = vpow.pop %v1096
    %v1098 = vadd.f32 %v1097, 1.0
    %v1099 = vrcp.pop %v1098
    %v1100 = vmul.f32 1.0, %v1099
    %v1101 = vtanh.pop %v1094
    %v1102 = vmul.f32 %v1100, %v964
    %1104 = vrot.lane.b32.xlu0 %v1101, 64
    %v1105 = vpop.permute.xlu0 %1104
    %v1107 = vmul.f32 %v1100, %v1105
    %1109 = vrot.lane.b32.xlu0 %v1107, 32
    %v1110 = vpop.permute.xlu0 %1109
    %v1112 = vadd.f32 %v1102, %v1110
    %v1113 = vtanh.pop %v1112
    %1115 = vrot.lane.b32.xlu0 %v1113, 64
    %v1116 = vpop.permute.xlu0 %1115
    %v1118 = vmul.f32 %v1100, %v1116
    %v1119 = vpack.c.bf16 %v1118, %v1118
    %v1121 = vunpack.c.l.b16 %v1119
    %v1122 = vpack.c.b16 %v1121, %v1121
    %1123 = vrot.lane.b32.xlu0 %v1122, 32
    %v1124 = vpop.permute.xlu0 %1123
    %s1126 = scalar_lea.vmem [#allocation10], 24
    %1127 = vst.msk [vmem:[%s1126] sm:$0xf] %vm238, %v1124
    %s1128 = scalar_lea.vmem [#allocation4], 28
    %v1129 = vld [vmem:[%s1128] sm:$0xf]
    %v1130 = vld [vmem:[#allocation7] sm:$0xf]
    %v1131 = vld [vmem:[#allocation7 + $0x4] sm:$0xf]
    %v1132 = vld [vmem:[#allocation9] sm:$0xf]
    %v1133 = vld [vmem:[#allocation9 + $0x4] sm:$0xf]
    %v1134 = vld [vmem:[#allocation9 + $0x8] sm:$0xf]
    %v1135 = vld [vmem:[#allocation9 + $0xc] sm:$0xf]
    %1136 = vrot.lane.b32.xlu0 %v1119, 32
    %v1137 = vpop.permute.xlu0 %1136
    %v1142 = vunpack.c.l.b16 %v1132
    %v1143 = vunpack.c.l.b16 %v1133
    %v1144 = vunpack.c.l.b16 %v1134
    %v1145 = vunpack.c.l.b16 %v1135
    %v1146 = vpack.c.b16 %v1143, %v1142
    %v1147 = vpack.c.b16 %v1145, %v1144
    %v1151 = vsel %vm104, %v1137, 0
    %1153 = vmatprep.subr.bf16.mxu0 0
    %1154 = vmatpush1.bf16.msra.mxu0 0
    %1155 = vmatprep.subr.bf16.mxu0 0
    %1156 = vmatpush1.bf16.msra.mxu0 0
    %1157 = vmatprep.subr.bf16.mxu0 0
    %1158 = vmatpush1.bf16.msra.mxu0 0
    %1159 = vmatprep.subr.bf16.mxu0 0
    %1160 = vmatpush1.bf16.msra.mxu0 0
    %1161 = vmatprep.subr.bf16.mxu0 0
    %1162 = vmatpush1.bf16.msra.mxu0 0
    %1163 = vmatprep.subr.bf16.mxu0 0
    %1164 = vmatpush1.bf16.msra.mxu0 0
    %1165 = vmatprep.subr.bf16.mxu0 0
    %1166 = vmatpush1.bf16.msra.mxu0 %v1147
    %1167 = vmatprep.subr.bf16.mxu0 0
    %1168 = vmatpush1.bf16.msra.mxu0 %v1146
    %1169 = vmatprep.subr.bf16.mxu0 0
    %1170 = vmatpush2.bf16.msra.mxu0 0
    %1171 = vmatprep.subr.bf16.mxu0 0
    %1172 = vmatpush2.bf16.msra.mxu0 0
    %1173 = vmatprep.subr.bf16.mxu0 0
    %1174 = vmatpush2.bf16.msra.mxu0 0
    %1175 = vmatprep.subr.bf16.mxu0 0
    %1176 = vmatpush2.bf16.msra.mxu0 0
    %1177 = vmatprep.subr.bf16.mxu0 0
    %1178 = vmatpush2.bf16.msra.mxu0 0
    %1179 = vmatprep.subr.bf16.mxu0 0
    %1180 = vmatpush2.bf16.msra.mxu0 0
    %1181 = vmatprep.subr.bf16.mxu0 0
    %1182 = vmatpush2.bf16.msra.mxu0 0
    %1183 = vmatprep.subr.bf16.mxu0 0
    %1184 = vmatpush2.bf16.msra.mxu0 0
    %1185 = vmatprep.mubr.bf16.mxu0 0
    %1186 = vmatmul.mubr.bf16.gmra.mxu0 %v1151
    %v1187 = vpop.f32.mrf.mxu0
    %v1188 = vadd.f32 0.0, %v1187
    %v1189 = vpop.f32.mrf.mxu0
    %v1190 = vpop.f32.mrf.mxu0
    %v1191 = vpop.f32.mrf.mxu0
    %1192 = vdwg.mxu0
    %v1195 = vunpack.c.l.b16 %v1130
    %v1196 = vunpack.c.l.b16 %v1131
    %v1197 = vpack.c.b16 %v1196, %v1195
    %v1200 = vsel %vm154, %v1129, 0
    %1202 = vmatprep.subr.bf16.mxu0 0
    %1203 = vmatpush1.bf16.msra.mxu0 0
    %1204 = vmatprep.subr.bf16.mxu0 0
    %1205 = vmatpush1.bf16.msra.mxu0 0
    %1206 = vmatprep.subr.bf16.mxu0 0
    %1207 = vmatpush1.bf16.msra.mxu0 0
    %1208 = vmatprep.subr.bf16.mxu0 0
    %1209 = vmatpush1.bf16.msra.mxu0 0
    %1210 = vmatprep.subr.bf16.mxu0 0
    %1211 = vmatpush1.bf16.msra.mxu0 0
    %1212 = vmatprep.subr.bf16.mxu0 0
    %1213 = vmatpush1.bf16.msra.mxu0 0
    %1214 = vmatprep.subr.bf16.mxu0 0
    %1215 = vmatpush1.bf16.msra.mxu0 0
    %1216 = vmatprep.subr.bf16.mxu0 0
    %1217 = vmatpush1.bf16.msra.mxu0 %v1197
    %1218 = vmatprep.subr.bf16.mxu0 0
    %1219 = vmatpush2.bf16.msra.mxu0 0
    %1220 = vmatprep.subr.bf16.mxu0 0
    %1221 = vmatpush2.bf16.msra.mxu0 0
    %1222 = vmatprep.subr.bf16.mxu0 0
    %1223 = vmatpush2.bf16.msra.mxu0 0
    %1224 = vmatprep.subr.bf16.mxu0 0
    %1225 = vmatpush2.bf16.msra.mxu0 0
    %1226 = vmatprep.subr.bf16.mxu0 0
    %1227 = vmatpush2.bf16.msra.mxu0 0
    %1228 = vmatprep.subr.bf16.mxu0 0
    %1229 = vmatpush2.bf16.msra.mxu0 0
    %1230 = vmatprep.subr.bf16.mxu0 0
    %1231 = vmatpush2.bf16.msra.mxu0 0
    %1232 = vmatprep.subr.bf16.mxu0 0
    %1233 = vmatpush2.bf16.msra.mxu0 0
    %1234 = vmatprep.mubr.bf16.mxu0 0
    %1235 = vmatmul.mubr.bf16.gmra.mxu0 %v1200
    %v1236 = vpop.f32.mrf.mxu0
    %v1237 = vadd.f32 %v1188, %v1236
    %v1238 = vpop.f32.mrf.mxu0
    %v1239 = vpop.f32.mrf.mxu0
    %v1240 = vpop.f32.mrf.mxu0
    %1241 = vdwg.mxu0
    %v1242 = vadd.f32 %v1237, %v201
    %v1243 = vxor.u32 %v1242, 2147483648
    %v1244 = vmul.f32 %v1243, 1.442695
    %v1245 = vpow.pop %v1244
    %v1246 = vadd.f32 %v1245, 1.0
    %v1247 = vrcp.pop %v1246
    %v1248 = vmul.f32 1.0, %v1247
    %v1249 = vtanh.pop %v1242
    %v1250 = vmul.f32 %v1248, %v1112
    %1252 = vrot.lane.b32.xlu0 %v1249, 64
    %v1253 = vpop.permute.xlu0 %1252
    %v1255 = vmul.f32 %v1248, %v1253
    %1257 = vrot.lane.b32.xlu0 %v1255, 32
    %v1258 = vpop.permute.xlu0 %1257
    %v1260 = vadd.f32 %v1250, %v1258
    %v1261 = vtanh.pop %v1260
    %1263 = vrot.lane.b32.xlu0 %v1261, 64
    %v1264 = vpop.permute.xlu0 %1263
    %v1266 = vmul.f32 %v1248, %v1264
    %v1267 = vpack.c.bf16 %v1266, %v1266
    %v1269 = vunpack.c.l.b16 %v1267
    %v1270 = vpack.c.b16 %v1269, %v1269
    %1271 = vrot.lane.b32.xlu0 %v1270, 32
    %v1272 = vpop.permute.xlu0 %1271
    %s1274 = scalar_lea.vmem [#allocation10], 28
    %1275 = vst.msk [vmem:[%s1274] sm:$0xf] %vm238, %v1272
    %1277 = vrot.lane.b32.xlu0 %v1266, 32
    %v1278 = vpop.permute.xlu0 %1277
    %1280 = vst.msk [vmem:[#allocation2] sm:$0xff] %vm104, %v1278
    %1282 = vrot.lane.b32.xlu0 %v1260, 96
    %v1283 = vpop.permute.xlu0 %1282
    %1285 = vst.msk [vmem:[#allocation3] sm:$0xff] %vm104, %v1283
    // Predicated region
    $region42: #{tpu_custom_call.1} parent=1 // pred_check
      %p1286 = pneg %p69
    $region43: #{tpu_custom_call.1} parent=1 // pred_check_branch
      %1288 = sbr.rel (%p1286) target = $region45
    $region44: #{tpu_custom_call.1} parent=1 // pred_region
      %v1289 = vpack.c.bf16 %v1260, %v1260
      %v1291 = vunpack.c.l.b16 %v1289
      %v1292 = vpack.c.b16 %v1291, %v1291
      %1293 = vrot.lane.b32.xlu0 %v1292, 96
      %v1294 = vpop.permute.xlu0 %1293
      %1296 = vst.msk [vmem:[#allocation11] sm:$0xf] %vm238, %v1294
    $region45: #{tpu_custom_call.1} parent=1 // pred_fallthru
      _
    // Predicated region
    $region46: #{tpu_custom_call.1} parent=1 // pred_check
      _
    $region47: #{tpu_custom_call.1} parent=1 // pred_check_branch
      %1298 = sbr.rel (0) target = $region49
    $region48: #{tpu_custom_call.1} parent=1 // pred_region
      %s1300 = ssub.s32 512, 512
      %1301 = vsyncadd [#allocation6], %s1300
      %s1302 = sshll.u32 [#allocation10], 4
      %s1303 = int_to_ptr.vmem [resolvable:$true] %s1302
      %1308 = dma.vmem_to_hbm [thread:$0]  %s1303, 512, %s6, [#allocation6], 64, 64, 4
    $region49: #{tpu_custom_call.1} parent=1 // pred_fallthru
      _
    // Predicated region
    $region50: #{tpu_custom_call.1} parent=1 // pred_check
      _
    $region51: #{tpu_custom_call.1} parent=1 // pred_check_branch
      %1310 = sbr.rel (0) target = $region53
    $region52: #{tpu_custom_call.1} parent=1 // pred_region
      %s1312 = ssub.s32 64, 64
      %1313 = vsyncadd [#allocation12], %s1312
      %s1315 = sshll.u32 [#allocation11], 4
      %s1316 = int_to_ptr.vmem [resolvable:$true] %s1315
      %1318 = dma.vmem_to_hbm [thread:$0]  %s1316, 64, %s7, [#allocation12]
    $region53: #{tpu_custom_call.1} parent=1 // pred_fallthru
      _
    // Predicated region
    $region54: #{tpu_custom_call.1} parent=1 // pred_check
      _
    $region55: #{tpu_custom_call.1} parent=1 // pred_check_branch
      %1320 = sbr.rel (0) target = $region57
    $region56: #{tpu_custom_call.1} parent=1 // pred_region
      %1321 = dma.done [#allocation6], 512
    $region57: #{tpu_custom_call.1} parent=1 // pred_fallthru
      _
    // Predicated region
    $region58: #{tpu_custom_call.1} parent=1 // pred_check
      _
    $region59: #{tpu_custom_call.1} parent=1 // pred_check_branch
      %1323 = sbr.rel (0) target = $region61
    $region60: #{tpu_custom_call.1} parent=1 // pred_region
      %1324 = dma.done [#allocation12], 64
    $region61: #{tpu_custom_call.1} parent=1 // pred_fallthru
      _
    %1325 = vsyncpa [#allocation5], 1
    %1326 = vsyncpa [#allocation8], 1
    %1327 = vsyncpa [#allocation6], 1
    %1328 = vsyncpa [#allocation12], 1

</llo_original>
